<compile_context>
chip_gen: v5e
topology: v5e:2x2
jax: 0.10.0
libtpu: 0.0.40
codegen_flags: <defaults>
</compile_context>

<pallas_src>
import functools

import numpy as np
import jax
import jax.numpy as jnp
from jax.experimental import pallas as pl
from jax.experimental.pallas import tpu as pltpu


# ----------------------------------------------------------------------------
# Constant-matrix helpers (trace-time constants, tiny)
# ----------------------------------------------------------------------------

def _interp_matrix(l_in, l_out):
    """M (l_out, l_in): out = M @ x reproduces F.interpolate(mode='linear', align_corners=True)."""
    if l_out == 1:
        src = np.zeros((1,), np.float64)
    else:
        src = np.arange(l_out, dtype=np.float64) * ((l_in - 1) / (l_out - 1))
    lo = np.clip(np.floor(src), 0, l_in - 1).astype(np.int64)
    hi = np.clip(lo + 1, 0, l_in - 1)
    frac = (src - lo).astype(np.float32)
    m = np.zeros((l_out, l_in), np.float32)
    rows = np.arange(l_out)
    m[rows, lo] += (1.0 - frac)
    m[rows, hi] += frac
    return jnp.asarray(m)


def _shift_matrices(l):
    """Sd: out[j] = in[j-1] (zero at j=0); Su: out[j] = in[j+1] (zero at j=L-1)."""
    sd = np.zeros((l, l), np.float32)
    su = np.zeros((l, l), np.float32)
    idx = np.arange(l - 1)
    sd[idx + 1, idx] = 1.0
    su[idx, idx + 1] = 1.0
    return jnp.asarray(sd), jnp.asarray(su)


# ----------------------------------------------------------------------------
# Fused decoder kernel
# ----------------------------------------------------------------------------
# refs layout:
#   x_ref (1, L_deep, C_deep)
#   per stage (processing order = reversed blocks):
#     M (L_out, L_in), Sd (L_out, L_out), Su (L_out, L_out),
#     y (1, L_out, C_y),
#     w1_skip (3, C_y, Cmid), w1_up (3, C_up, Cmid), b1 (1, Cmid),
#     w2 (3, Cmid, Cmid), b2 (1, Cmid)
#   wf (C_last, C_out), bf (1, C_out)
#   out_ref (1, L_final, C_out)

def _decoder_kernel(num_stages, *refs):
    x = refs[0][0]                      # (L, C) channels-last, f32
    wf_ref, bf_ref, out_ref = refs[-3], refs[-2], refs[-1]

    off = 1
    for _ in range(num_stages):
        (m_ref, sd_ref, su_ref, y_ref,
         w1s_ref, w1u_ref, b1_ref, w2_ref, b2_ref) = refs[off:off + 9]
        off += 9

        y = y_ref[0]                                            # (L_out, C_y)
        l_out = y.shape[0]
        sd = sd_ref[...]
        su = su_ref[...]

        # F.interpolate(..., mode='linear', align_corners=True) as a matmul over L.
        x_up = jnp.dot(m_ref[...], x, preferred_element_type=jnp.float32)

        def conv3_relu(parts, b_ref, sd=sd, su=su, l_out=l_out):
            # k=3, padding=1 conv: tap matmuls over channels + constant shift matmuls over L.
            cout = b_ref.shape[-1]
            acc = jnp.broadcast_to(b_ref[...], (l_out, cout)).astype(jnp.float32)
            for inp, w_ref in parts:
                h0 = jnp.dot(inp, w_ref[0], preferred_element_type=jnp.float32)
                h1 = jnp.dot(inp, w_ref[1], preferred_element_type=jnp.float32)
                h2 = jnp.dot(inp, w_ref[2], preferred_element_type=jnp.float32)
                acc = acc + jnp.dot(sd, h0, preferred_element_type=jnp.float32)
                acc = acc + h1
                acc = acc + jnp.dot(su, h2, preferred_element_type=jnp.float32)
            return jnp.maximum(acc, 0.0)

        # conv1 over torch.cat([y, x_up], channels) without materializing the concat.
        h = conv3_relu([(y, w1s_ref), (x_up, w1u_ref)], b1_ref)
        # conv2
        x = conv3_relu([(h, w2_ref)], b2_ref)

    # final 1x1 conv
    out = jnp.dot(x, wf_ref[...], preferred_element_type=jnp.float32) + bf_ref[...]
    out_ref[0] = out.astype(out_ref.dtype)


# ----------------------------------------------------------------------------
# BlockSpec helpers
# ----------------------------------------------------------------------------

def _shared_spec(arr):
    nd = arr.ndim
    return pl.BlockSpec(arr.shape, lambda i, _nd=nd: (0,) * _nd)


def _batched_spec(arr):
    _, l, c = arr.shape
    return pl.BlockSpec((1, l, c), lambda i: (i, 0, 0))


# ----------------------------------------------------------------------------
# Parameters: init (PyTorch-like layout) + one-time preparation for the kernel
# ----------------------------------------------------------------------------

def init_unet_decoder_params(key, out_channels, num_stages, c0):
    blocks = []
    for i in range(num_stages - 1):
        cin = (2 ** (i + 1) + 2 ** (i + 2)) * c0
        cmid = 2 ** (i + 1) * c0
        key, k1, k2, k3, k4 = jax.random.split(key, 5)
        blocks.append({
            "w1": jax.random.normal(k1, (cmid, cin, 3), jnp.float32) * 0.05,
            "b1": jax.random.normal(k2, (cmid,), jnp.float32) * 0.05,
            "w2": jax.random.normal(k3, (cmid, cmid, 3), jnp.float32) * 0.05,
            "b2": jax.random.normal(k4, (cmid,), jnp.float32) * 0.05,
        })
    key, kf1, kf2 = jax.random.split(key, 3)
    final = {
        "w": jax.random.normal(kf1, (out_channels, 2 * c0, 1), jnp.float32) * 0.05,
        "b": jax.random.normal(kf2, (out_channels,), jnp.float32) * 0.05,
    }
    return {"blocks": blocks, "final": final}


def prepare_decoder_params(params):
    """One-time reshuffle: transpose/split conv weights into channels-last matmul form."""
    stages = []
    for blk in params["blocks"]:
        w1, b1, w2, b2 = blk["w1"], blk["b1"], blk["w2"], blk["b2"]
        cmid = w1.shape[0]            # skip (y) channels == block out channels
        stages.append({
            "w1s": jnp.transpose(w1[:, :cmid, :], (2, 1, 0)).astype(jnp.float32),  # (3,Cy,Cmid)
            "w1u": jnp.transpose(w1[:, cmid:, :], (2, 1, 0)).astype(jnp.float32),  # (3,Cup,Cmid)
            "b1": b1.reshape(1, -1).astype(jnp.float32),
            "w2": jnp.transpose(w2, (2, 1, 0)).astype(jnp.float32),                # (3,Cmid,Cmid)
            "b2": b2.reshape(1, -1).astype(jnp.float32),
        })
    wf = jnp.transpose(params["final"]["w"][:, :, 0], (1, 0)).astype(jnp.float32)  # (Cin,Cout)
    bf = params["final"]["b"].reshape(1, -1).astype(jnp.float32)
    return {"blocks": stages, "final": {"w": wf, "b": bf}}


# ----------------------------------------------------------------------------
# Forward: single fused pallas_call over the whole decoder
# ----------------------------------------------------------------------------

def unet_decoder_forward(prep, x, acts):
    """x: (N, 2**num_stages*c0, L_deep); acts[j]: (N, 2**(j+1)*c0, L_j). Returns (N, C_out, L_0)."""
    n = x.shape[0]
    x_nlc = jnp.transpose(x, (0, 2, 1)).astype(jnp.float32)      # transpose once at entry

    inputs = [x_nlc]
    specs = [_batched_spec(x_nlc)]

    l_cur = x_nlc.shape[1]
    stages = list(zip(reversed(acts), reversed(prep["blocks"])))
    for y, blk in stages:
        y_nlc = jnp.transpose(y, (0, 2, 1)).astype(jnp.float32)
        l_out = y_nlc.shape[1]
        m = _interp_matrix(l_cur, l_out)
        sd, su = _shift_matrices(l_out)
        for a in (m, sd, su):
            inputs.append(a)
            specs.append(_shared_spec(a))
        inputs.append(y_nlc)
        specs.append(_batched_spec(y_nlc))
        for a in (blk["w1s"], blk["w1u"], blk["b1"], blk["w2"], blk["b2"]):
            inputs.append(a)
            specs.append(_shared_spec(a))
        l_cur = l_out

    wf, bf = prep["final"]["w"], prep["final"]["b"]
    inputs += [wf, bf]
    specs += [_shared_spec(wf), _shared_spec(bf)]
    cout = wf.shape[1]

    out_nlc = pl.pallas_call(
        functools.partial(_decoder_kernel, len(stages)),
        out_shape=jax.ShapeDtypeStruct((n, l_cur, cout), jnp.float32),
        grid=(n,),
        in_specs=specs,
        out_specs=pl.BlockSpec((1, l_cur, cout), lambda i: (i, 0, 0)),
        compiler_params=pltpu.CompilerParams(
            dimension_semantics=("parallel",)),   # batch across TCs on v7x
    )(*inputs)
    return jnp.transpose(out_nlc, (0, 2, 1))                     # transpose once at exit


# ----------------------------------------------------------------------------
# Pure-JAX reference (PyTorch semantics) for a correctness check
# ----------------------------------------------------------------------------

def _ref_conv3(x_ncl, w, b):
    l = x_ncl.shape[2]
    xp = jnp.pad(x_ncl, ((0, 0), (0, 0), (1, 1)))
    acc = b[None, :, None]
    for k in range(3):
        acc = acc + jnp.einsum("ncl,oc->nol", xp[:, :, k:k + l], w[:, :, k])
    return acc


def _ref_forward(params, x, acts):
    for y, blk in zip(reversed(acts), reversed(params["blocks"])):
        m = _interp_matrix(x.shape[2], y.shape[2])
        x = jnp.einsum("nci,ji->ncj", x, m)
        x = jnp.concatenate([y, x], axis=1)
        x = jnp.maximum(_ref_conv3(x, blk["w1"], blk["b1"]), 0.0)
        x = jnp.maximum(_ref_conv3(x, blk["w2"], blk["b2"]), 0.0)
    wf = params["final"]["w"][:, :, 0]
    return jnp.einsum("ncl,oc->nol", x, wf) + params["final"]["b"][None, :, None]


# ----------------------------------------------------------------------------

if __name__ == "__main__":
    key = jax.random.PRNGKey(0)
    num_stages = 3
    c0 = 4              # initial_num_channels
    out_channels = 2
    n = 2
    l_deep = 4

    kx, ka0, ka1, kp = jax.random.split(key, 4)
    # Deepest feature map fed to the decoder: 2**num_stages * c0 channels.
    x = jax.random.normal(kx, (n, 2 ** num_stages * c0, l_deep), jnp.float32)
    # Encoder activations (shallow -> deep), consumed in reverse.
    acts = [
        jax.random.normal(ka0, (n, 2 * c0, 16), jnp.float32),   # 8 ch,  L=16
        jax.random.normal(ka1, (n, 4 * c0, 8), jnp.float32),    # 16 ch, L=8
    ]
    params = init_unet_decoder_params(kp, out_channels, num_stages, c0)
    prep = prepare_decoder_params(params)                       # hoisted, done once

    out = unet_decoder_forward(prep, x, acts)
    out = jax.block_until_ready(out)

    assert out.shape == (n, out_channels, 16), out.shape
    assert bool(jnp.all(jnp.isfinite(out)))

    ref = jax.block_until_ready(_ref_forward(params, x, acts))
    err = float(jnp.max(jnp.abs(out - ref)))
    assert err < 5e-3, f"mismatch vs reference: {err}"

    print("KERNEL_OK")
</pallas_src>

<mosaic_0001>
module attributes {stable_mosaic.version = 11 : i64} {
  func.func @_decoder_kernel(%arg0: i32, %arg1: memref<1x4x32xf32, #tpu.memory_space<vmem>>, %arg2: memref<8x4xf32, #tpu.memory_space<vmem>>, %arg3: memref<8x8xf32, #tpu.memory_space<vmem>>, %arg4: memref<8x8xf32, #tpu.memory_space<vmem>>, %arg5: memref<1x8x16xf32, #tpu.memory_space<vmem>>, %arg6: memref<3x16x16xf32, #tpu.memory_space<vmem>>, %arg7: memref<3x32x16xf32, #tpu.memory_space<vmem>>, %arg8: memref<1x16xf32, #tpu.memory_space<vmem>>, %arg9: memref<3x16x16xf32, #tpu.memory_space<vmem>>, %arg10: memref<1x16xf32, #tpu.memory_space<vmem>>, %arg11: memref<16x8xf32, #tpu.memory_space<vmem>>, %arg12: memref<16x16xf32, #tpu.memory_space<vmem>>, %arg13: memref<16x16xf32, #tpu.memory_space<vmem>>, %arg14: memref<1x16x8xf32, #tpu.memory_space<vmem>>, %arg15: memref<3x8x8xf32, #tpu.memory_space<vmem>>, %arg16: memref<3x16x8xf32, #tpu.memory_space<vmem>>, %arg17: memref<1x8xf32, #tpu.memory_space<vmem>>, %arg18: memref<3x8x8xf32, #tpu.memory_space<vmem>>, %arg19: memref<1x8xf32, #tpu.memory_space<vmem>>, %arg20: memref<8x2xf32, #tpu.memory_space<vmem>>, %arg21: memref<1x2xf32, #tpu.memory_space<vmem>>, %arg22: memref<1x16x2xf32, #tpu.memory_space<vmem>>) attributes {dimension_semantics = [#tpu.dimension_semantics<parallel>], iteration_bounds = array<i64: 2>, scalar_prefetch = 0 : i64, scratch_operands = 0 : i64, tpu.core_type = #tpu.core_type<tc>, window_params = [{transform_indices = @transform_0, window_bounds = array<i64: 1, 4, 32>}, {pipeline_mode = #tpu.pipeline_mode<synchronous>, transform_indices = @transform_1, window_bounds = array<i64: 8, 4>}, {pipeline_mode = #tpu.pipeline_mode<synchronous>, transform_indices = @transform_2, window_bounds = array<i64: 8, 8>}, {pipeline_mode = #tpu.pipeline_mode<synchronous>, transform_indices = @transform_3, window_bounds = array<i64: 8, 8>}, {transform_indices = @transform_4, window_bounds = array<i64: 1, 8, 16>}, {pipeline_mode = #tpu.pipeline_mode<synchronous>, transform_indices = @transform_5, window_bounds = array<i64: 3, 16, 16>}, {pipeline_mode = #tpu.pipeline_mode<synchronous>, transform_indices = @transform_6, window_bounds = array<i64: 3, 32, 16>}, {pipeline_mode = #tpu.pipeline_mode<synchronous>, transform_indices = @transform_7, window_bounds = array<i64: 1, 16>}, {pipeline_mode = #tpu.pipeline_mode<synchronous>, transform_indices = @transform_8, window_bounds = array<i64: 3, 16, 16>}, {pipeline_mode = #tpu.pipeline_mode<synchronous>, transform_indices = @transform_9, window_bounds = array<i64: 1, 16>}, {pipeline_mode = #tpu.pipeline_mode<synchronous>, transform_indices = @transform_10, window_bounds = array<i64: 16, 8>}, {pipeline_mode = #tpu.pipeline_mode<synchronous>, transform_indices = @transform_11, window_bounds = array<i64: 16, 16>}, {pipeline_mode = #tpu.pipeline_mode<synchronous>, transform_indices = @transform_12, window_bounds = array<i64: 16, 16>}, {transform_indices = @transform_13, window_bounds = array<i64: 1, 16, 8>}, {pipeline_mode = #tpu.pipeline_mode<synchronous>, transform_indices = @transform_14, window_bounds = array<i64: 3, 8, 8>}, {pipeline_mode = #tpu.pipeline_mode<synchronous>, transform_indices = @transform_15, window_bounds = array<i64: 3, 16, 8>}, {pipeline_mode = #tpu.pipeline_mode<synchronous>, transform_indices = @transform_16, window_bounds = array<i64: 1, 8>}, {pipeline_mode = #tpu.pipeline_mode<synchronous>, transform_indices = @transform_17, window_bounds = array<i64: 3, 8, 8>}, {pipeline_mode = #tpu.pipeline_mode<synchronous>, transform_indices = @transform_18, window_bounds = array<i64: 1, 8>}, {pipeline_mode = #tpu.pipeline_mode<synchronous>, transform_indices = @transform_19, window_bounds = array<i64: 8, 2>}, {pipeline_mode = #tpu.pipeline_mode<synchronous>, transform_indices = @transform_20, window_bounds = array<i64: 1, 2>}, {transform_indices = @transform_21, window_bounds = array<i64: 1, 16, 2>}]} {
    %c0 = arith.constant 0 : index
    %c0_0 = arith.constant 0 : index
    %c0_1 = arith.constant 0 : index
    %0 = vector.load %arg1[%c0, %c0_0, %c0_1] : memref<1x4x32xf32, #tpu.memory_space<vmem>>, vector<1x4x32xf32>
    %1 = vector.shape_cast %0 : vector<1x4x32xf32> to vector<4x32xf32>
    %c0_2 = arith.constant 0 : index
    %c0_3 = arith.constant 0 : index
    %c0_4 = arith.constant 0 : index
    %2 = vector.load %arg5[%c0_2, %c0_3, %c0_4] : memref<1x8x16xf32, #tpu.memory_space<vmem>>, vector<1x8x16xf32>
    %3 = vector.shape_cast %2 : vector<1x8x16xf32> to vector<8x16xf32>
    %c0_5 = arith.constant 0 : index
    %c0_6 = arith.constant 0 : index
    %4 = vector.load %arg3[%c0_5, %c0_6] : memref<8x8xf32, #tpu.memory_space<vmem>>, vector<8x8xf32>
    %c0_7 = arith.constant 0 : index
    %c0_8 = arith.constant 0 : index
    %5 = vector.load %arg4[%c0_7, %c0_8] : memref<8x8xf32, #tpu.memory_space<vmem>>, vector<8x8xf32>
    %c0_9 = arith.constant 0 : index
    %c0_10 = arith.constant 0 : index
    %6 = vector.load %arg2[%c0_9, %c0_10] : memref<8x4xf32, #tpu.memory_space<vmem>>, vector<8x4xf32>
    %cst = arith.constant dense<0.000000e+00> : vector<8x32xf32>
    %7 = tpu.matmul %6, %1, %cst {dimension_numbers = #tpu.dot_dimension_numbers<[1], [0], [0], [1], [0, 0, 1, 1], [], []>} : vector<8x4xf32>, vector<4x32xf32>, vector<8x32xf32> -> vector<8x32xf32>
    %c0_11 = arith.constant 0 : index
    %c0_12 = arith.constant 0 : index
    %8 = vector.load %arg8[%c0_11, %c0_12] : memref<1x16xf32, #tpu.memory_space<vmem>>, vector<1x16xf32>
    %9 = vector.shape_cast %8 : vector<1x16xf32> to vector<1x16xf32>
    %10 = vector.broadcast %9 : vector<1x16xf32> to vector<8x16xf32>
    %c0_13 = arith.constant 0 : index
    %c0_14 = arith.constant 0 : index
    %c0_15 = arith.constant 0 : index
    %11 = vector.load %arg6[%c0_13, %c0_14, %c0_15] : memref<3x16x16xf32, #tpu.memory_space<vmem>>, vector<1x16x16xf32>
    %12 = vector.shape_cast %11 : vector<1x16x16xf32> to vector<16x16xf32>
    %cst_16 = arith.constant dense<0.000000e+00> : vector<8x16xf32>
    %13 = tpu.matmul %3, %12, %cst_16 {dimension_numbers = #tpu.dot_dimension_numbers<[1], [0], [0], [1], [0, 0, 1, 1], [], []>} : vector<8x16xf32>, vector<16x16xf32>, vector<8x16xf32> -> vector<8x16xf32>
    %c1 = arith.constant 1 : index
    %c0_17 = arith.constant 0 : index
    %c0_18 = arith.constant 0 : index
    %14 = vector.load %arg6[%c1, %c0_17, %c0_18] : memref<3x16x16xf32, #tpu.memory_space<vmem>>, vector<1x16x16xf32>
    %15 = vector.shape_cast %14 : vector<1x16x16xf32> to vector<16x16xf32>
    %cst_19 = arith.constant dense<0.000000e+00> : vector<8x16xf32>
    %16 = tpu.matmul %3, %15, %cst_19 {dimension_numbers = #tpu.dot_dimension_numbers<[1], [0], [0], [1], [0, 0, 1, 1], [], []>} : vector<8x16xf32>, vector<16x16xf32>, vector<8x16xf32> -> vector<8x16xf32>
    %c2 = arith.constant 2 : index
    %c0_20 = arith.constant 0 : index
    %c0_21 = arith.constant 0 : index
    %17 = vector.load %arg6[%c2, %c0_20, %c0_21] : memref<3x16x16xf32, #tpu.memory_space<vmem>>, vector<1x16x16xf32>
    %18 = vector.shape_cast %17 : vector<1x16x16xf32> to vector<16x16xf32>
    %cst_22 = arith.constant dense<0.000000e+00> : vector<8x16xf32>
    %19 = tpu.matmul %3, %18, %cst_22 {dimension_numbers = #tpu.dot_dimension_numbers<[1], [0], [0], [1], [0, 0, 1, 1], [], []>} : vector<8x16xf32>, vector<16x16xf32>, vector<8x16xf32> -> vector<8x16xf32>
    %cst_23 = arith.constant dense<0.000000e+00> : vector<8x16xf32>
    %20 = tpu.matmul %4, %13, %cst_23 {dimension_numbers = #tpu.dot_dimension_numbers<[1], [0], [0], [1], [0, 0, 1, 1], [], []>} : vector<8x8xf32>, vector<8x16xf32>, vector<8x16xf32> -> vector<8x16xf32>
    %21 = arith.addf %10, %20 : vector<8x16xf32>
    %22 = arith.addf %21, %16 : vector<8x16xf32>
    %cst_24 = arith.constant dense<0.000000e+00> : vector<8x16xf32>
    %23 = tpu.matmul %5, %19, %cst_24 {dimension_numbers = #tpu.dot_dimension_numbers<[1], [0], [0], [1], [0, 0, 1, 1], [], []>} : vector<8x8xf32>, vector<8x16xf32>, vector<8x16xf32> -> vector<8x16xf32>
    %24 = arith.addf %22, %23 : vector<8x16xf32>
    %c0_25 = arith.constant 0 : index
    %c0_26 = arith.constant 0 : index
    %c0_27 = arith.constant 0 : index
    %25 = vector.load %arg7[%c0_25, %c0_26, %c0_27] : memref<3x32x16xf32, #tpu.memory_space<vmem>>, vector<1x32x16xf32>
    %26 = vector.shape_cast %25 : vector<1x32x16xf32> to vector<32x16xf32>
    %cst_28 = arith.constant dense<0.000000e+00> : vector<8x16xf32>
    %27 = tpu.matmul %7, %26, %cst_28 {dimension_numbers = #tpu.dot_dimension_numbers<[1], [0], [0], [1], [0, 0, 1, 1], [], []>} : vector<8x32xf32>, vector<32x16xf32>, vector<8x16xf32> -> vector<8x16xf32>
    %c1_29 = arith.constant 1 : index
    %c0_30 = arith.constant 0 : index
    %c0_31 = arith.constant 0 : index
    %28 = vector.load %arg7[%c1_29, %c0_30, %c0_31] : memref<3x32x16xf32, #tpu.memory_space<vmem>>, vector<1x32x16xf32>
    %29 = vector.shape_cast %28 : vector<1x32x16xf32> to vector<32x16xf32>
    %cst_32 = arith.constant dense<0.000000e+00> : vector<8x16xf32>
    %30 = tpu.matmul %7, %29, %cst_32 {dimension_numbers = #tpu.dot_dimension_numbers<[1], [0], [0], [1], [0, 0, 1, 1], [], []>} : vector<8x32xf32>, vector<32x16xf32>, vector<8x16xf32> -> vector<8x16xf32>
    %c2_33 = arith.constant 2 : index
    %c0_34 = arith.constant 0 : index
    %c0_35 = arith.constant 0 : index
    %31 = vector.load %arg7[%c2_33, %c0_34, %c0_35] : memref<3x32x16xf32, #tpu.memory_space<vmem>>, vector<1x32x16xf32>
    %32 = vector.shape_cast %31 : vector<1x32x16xf32> to vector<32x16xf32>
    %cst_36 = arith.constant dense<0.000000e+00> : vector<8x16xf32>
    %33 = tpu.matmul %7, %32, %cst_36 {dimension_numbers = #tpu.dot_dimension_numbers<[1], [0], [0], [1], [0, 0, 1, 1], [], []>} : vector<8x32xf32>, vector<32x16xf32>, vector<8x16xf32> -> vector<8x16xf32>
    %cst_37 = arith.constant dense<0.000000e+00> : vector<8x16xf32>
    %34 = tpu.matmul %4, %27, %cst_37 {dimension_numbers = #tpu.dot_dimension_numbers<[1], [0], [0], [1], [0, 0, 1, 1], [], []>} : vector<8x8xf32>, vector<8x16xf32>, vector<8x16xf32> -> vector<8x16xf32>
    %35 = arith.addf %24, %34 : vector<8x16xf32>
    %36 = arith.addf %35, %30 : vector<8x16xf32>
    %cst_38 = arith.constant dense<0.000000e+00> : vector<8x16xf32>
    %37 = tpu.matmul %5, %33, %cst_38 {dimension_numbers = #tpu.dot_dimension_numbers<[1], [0], [0], [1], [0, 0, 1, 1], [], []>} : vector<8x8xf32>, vector<8x16xf32>, vector<8x16xf32> -> vector<8x16xf32>
    %38 = arith.addf %36, %37 : vector<8x16xf32>
    %cst_39 = arith.constant 0.000000e+00 : f32
    %39 = vector.broadcast %cst_39 : f32 to vector<8x16xf32>
    %40 = arith.maximumf %38, %39 : vector<8x16xf32>
    %c0_40 = arith.constant 0 : index
    %c0_41 = arith.constant 0 : index
    %41 = vector.load %arg10[%c0_40, %c0_41] : memref<1x16xf32, #tpu.memory_space<vmem>>, vector<1x16xf32>
    %42 = vector.shape_cast %41 : vector<1x16xf32> to vector<1x16xf32>
    %43 = vector.broadcast %42 : vector<1x16xf32> to vector<8x16xf32>
    %c0_42 = arith.constant 0 : index
    %c0_43 = arith.constant 0 : index
    %c0_44 = arith.constant 0 : index
    %44 = vector.load %arg9[%c0_42, %c0_43, %c0_44] : memref<3x16x16xf32, #tpu.memory_space<vmem>>, vector<1x16x16xf32>
    %45 = vector.shape_cast %44 : vector<1x16x16xf32> to vector<16x16xf32>
    %cst_45 = arith.constant dense<0.000000e+00> : vector<8x16xf32>
    %46 = tpu.matmul %40, %45, %cst_45 {dimension_numbers = #tpu.dot_dimension_numbers<[1], [0], [0], [1], [0, 0, 1, 1], [], []>} : vector<8x16xf32>, vector<16x16xf32>, vector<8x16xf32> -> vector<8x16xf32>
    %c1_46 = arith.constant 1 : index
    %c0_47 = arith.constant 0 : index
    %c0_48 = arith.constant 0 : index
    %47 = vector.load %arg9[%c1_46, %c0_47, %c0_48] : memref<3x16x16xf32, #tpu.memory_space<vmem>>, vector<1x16x16xf32>
    %48 = vector.shape_cast %47 : vector<1x16x16xf32> to vector<16x16xf32>
    %cst_49 = arith.constant dense<0.000000e+00> : vector<8x16xf32>
    %49 = tpu.matmul %40, %48, %cst_49 {dimension_numbers = #tpu.dot_dimension_numbers<[1], [0], [0], [1], [0, 0, 1, 1], [], []>} : vector<8x16xf32>, vector<16x16xf32>, vector<8x16xf32> -> vector<8x16xf32>
    %c2_50 = arith.constant 2 : index
    %c0_51 = arith.constant 0 : index
    %c0_52 = arith.constant 0 : index
    %50 = vector.load %arg9[%c2_50, %c0_51, %c0_52] : memref<3x16x16xf32, #tpu.memory_space<vmem>>, vector<1x16x16xf32>
    %51 = vector.shape_cast %50 : vector<1x16x16xf32> to vector<16x16xf32>
    %cst_53 = arith.constant dense<0.000000e+00> : vector<8x16xf32>
    %52 = tpu.matmul %40, %51, %cst_53 {dimension_numbers = #tpu.dot_dimension_numbers<[1], [0], [0], [1], [0, 0, 1, 1], [], []>} : vector<8x16xf32>, vector<16x16xf32>, vector<8x16xf32> -> vector<8x16xf32>
    %cst_54 = arith.constant dense<0.000000e+00> : vector<8x16xf32>
    %53 = tpu.matmul %4, %46, %cst_54 {dimension_numbers = #tpu.dot_dimension_numbers<[1], [0], [0], [1], [0, 0, 1, 1], [], []>} : vector<8x8xf32>, vector<8x16xf32>, vector<8x16xf32> -> vector<8x16xf32>
    %54 = arith.addf %43, %53 : vector<8x16xf32>
    %55 = arith.addf %54, %49 : vector<8x16xf32>
    %cst_55 = arith.constant dense<0.000000e+00> : vector<8x16xf32>
    %56 = tpu.matmul %5, %52, %cst_55 {dimension_numbers = #tpu.dot_dimension_numbers<[1], [0], [0], [1], [0, 0, 1, 1], [], []>} : vector<8x8xf32>, vector<8x16xf32>, vector<8x16xf32> -> vector<8x16xf32>
    %57 = arith.addf %55, %56 : vector<8x16xf32>
    %cst_56 = arith.constant 0.000000e+00 : f32
    %58 = vector.broadcast %cst_56 : f32 to vector<8x16xf32>
    %59 = arith.maximumf %57, %58 : vector<8x16xf32>
    %c0_57 = arith.constant 0 : index
    %c0_58 = arith.constant 0 : index
    %c0_59 = arith.constant 0 : index
    %60 = vector.load %arg14[%c0_57, %c0_58, %c0_59] : memref<1x16x8xf32, #tpu.memory_space<vmem>>, vector<1x16x8xf32>
    %61 = vector.shape_cast %60 : vector<1x16x8xf32> to vector<16x8xf32>
    %c0_60 = arith.constant 0 : index
    %c0_61 = arith.constant 0 : index
    %62 = vector.load %arg12[%c0_60, %c0_61] : memref<16x16xf32, #tpu.memory_space<vmem>>, vector<16x16xf32>
    %c0_62 = arith.constant 0 : index
    %c0_63 = arith.constant 0 : index
    %63 = vector.load %arg13[%c0_62, %c0_63] : memref<16x16xf32, #tpu.memory_space<vmem>>, vector<16x16xf32>
    %c0_64 = arith.constant 0 : index
    %c0_65 = arith.constant 0 : index
    %64 = vector.load %arg11[%c0_64, %c0_65] : memref<16x8xf32, #tpu.memory_space<vmem>>, vector<16x8xf32>
    %cst_66 = arith.constant dense<0.000000e+00> : vector<16x16xf32>
    %65 = tpu.matmul %64, %59, %cst_66 {dimension_numbers = #tpu.dot_dimension_numbers<[1], [0], [0], [1], [0, 0, 1, 1], [], []>} : vector<16x8xf32>, vector<8x16xf32>, vector<16x16xf32> -> vector<16x16xf32>
    %c0_67 = arith.constant 0 : index
    %c0_68 = arith.constant 0 : index
    %66 = vector.load %arg17[%c0_67, %c0_68] : memref<1x8xf32, #tpu.memory_space<vmem>>, vector<1x8xf32>
    %67 = vector.shape_cast %66 : vector<1x8xf32> to vector<1x8xf32>
    %68 = vector.broadcast %67 : vector<1x8xf32> to vector<16x8xf32>
    %c0_69 = arith.constant 0 : index
    %c0_70 = arith.constant 0 : index
    %c0_71 = arith.constant 0 : index
    %69 = vector.load %arg15[%c0_69, %c0_70, %c0_71] : memref<3x8x8xf32, #tpu.memory_space<vmem>>, vector<1x8x8xf32>
    %70 = vector.shape_cast %69 : vector<1x8x8xf32> to vector<8x8xf32>
    %cst_72 = arith.constant dense<0.000000e+00> : vector<16x8xf32>
    %71 = tpu.matmul %61, %70, %cst_72 {dimension_numbers = #tpu.dot_dimension_numbers<[1], [0], [0], [1], [0, 0, 1, 1], [], []>} : vector<16x8xf32>, vector<8x8xf32>, vector<16x8xf32> -> vector<16x8xf32>
    %c1_73 = arith.constant 1 : index
    %c0_74 = arith.constant 0 : index
    %c0_75 = arith.constant 0 : index
    %72 = vector.load %arg15[%c1_73, %c0_74, %c0_75] : memref<3x8x8xf32, #tpu.memory_space<vmem>>, vector<1x8x8xf32>
    %73 = vector.shape_cast %72 : vector<1x8x8xf32> to vector<8x8xf32>
    %cst_76 = arith.constant dense<0.000000e+00> : vector<16x8xf32>
    %74 = tpu.matmul %61, %73, %cst_76 {dimension_numbers = #tpu.dot_dimension_numbers<[1], [0], [0], [1], [0, 0, 1, 1], [], []>} : vector<16x8xf32>, vector<8x8xf32>, vector<16x8xf32> -> vector<16x8xf32>
    %c2_77 = arith.constant 2 : index
    %c0_78 = arith.constant 0 : index
    %c0_79 = arith.constant 0 : index
    %75 = vector.load %arg15[%c2_77, %c0_78, %c0_79] : memref<3x8x8xf32, #tpu.memory_space<vmem>>, vector<1x8x8xf32>
    %76 = vector.shape_cast %75 : vector<1x8x8xf32> to vector<8x8xf32>
    %cst_80 = arith.constant dense<0.000000e+00> : vector<16x8xf32>
    %77 = tpu.matmul %61, %76, %cst_80 {dimension_numbers = #tpu.dot_dimension_numbers<[1], [0], [0], [1], [0, 0, 1, 1], [], []>} : vector<16x8xf32>, vector<8x8xf32>, vector<16x8xf32> -> vector<16x8xf32>
    %cst_81 = arith.constant dense<0.000000e+00> : vector<16x8xf32>
    %78 = tpu.matmul %62, %71, %cst_81 {dimension_numbers = #tpu.dot_dimension_numbers<[1], [0], [0], [1], [0, 0, 1, 1], [], []>} : vector<16x16xf32>, vector<16x8xf32>, vector<16x8xf32> -> vector<16x8xf32>
    %79 = arith.addf %68, %78 : vector<16x8xf32>
    %80 = arith.addf %79, %74 : vector<16x8xf32>
    %cst_82 = arith.constant dense<0.000000e+00> : vector<16x8xf32>
    %81 = tpu.matmul %63, %77, %cst_82 {dimension_numbers = #tpu.dot_dimension_numbers<[1], [0], [0], [1], [0, 0, 1, 1], [], []>} : vector<16x16xf32>, vector<16x8xf32>, vector<16x8xf32> -> vector<16x8xf32>
    %82 = arith.addf %80, %81 : vector<16x8xf32>
    %c0_83 = arith.constant 0 : index
    %c0_84 = arith.constant 0 : index
    %c0_85 = arith.constant 0 : index
    %83 = vector.load %arg16[%c0_83, %c0_84, %c0_85] : memref<3x16x8xf32, #tpu.memory_space<vmem>>, vector<1x16x8xf32>
    %84 = vector.shape_cast %83 : vector<1x16x8xf32> to vector<16x8xf32>
    %cst_86 = arith.constant dense<0.000000e+00> : vector<16x8xf32>
    %85 = tpu.matmul %65, %84, %cst_86 {dimension_numbers = #tpu.dot_dimension_numbers<[1], [0], [0], [1], [0, 0, 1, 1], [], []>} : vector<16x16xf32>, vector<16x8xf32>, vector<16x8xf32> -> vector<16x8xf32>
    %c1_87 = arith.constant 1 : index
    %c0_88 = arith.constant 0 : index
    %c0_89 = arith.constant 0 : index
    %86 = vector.load %arg16[%c1_87, %c0_88, %c0_89] : memref<3x16x8xf32, #tpu.memory_space<vmem>>, vector<1x16x8xf32>
    %87 = vector.shape_cast %86 : vector<1x16x8xf32> to vector<16x8xf32>
    %cst_90 = arith.constant dense<0.000000e+00> : vector<16x8xf32>
    %88 = tpu.matmul %65, %87, %cst_90 {dimension_numbers = #tpu.dot_dimension_numbers<[1], [0], [0], [1], [0, 0, 1, 1], [], []>} : vector<16x16xf32>, vector<16x8xf32>, vector<16x8xf32> -> vector<16x8xf32>
    %c2_91 = arith.constant 2 : index
    %c0_92 = arith.constant 0 : index
    %c0_93 = arith.constant 0 : index
    %89 = vector.load %arg16[%c2_91, %c0_92, %c0_93] : memref<3x16x8xf32, #tpu.memory_space<vmem>>, vector<1x16x8xf32>
    %90 = vector.shape_cast %89 : vector<1x16x8xf32> to vector<16x8xf32>
    %cst_94 = arith.constant dense<0.000000e+00> : vector<16x8xf32>
    %91 = tpu.matmul %65, %90, %cst_94 {dimension_numbers = #tpu.dot_dimension_numbers<[1], [0], [0], [1], [0, 0, 1, 1], [], []>} : vector<16x16xf32>, vector<16x8xf32>, vector<16x8xf32> -> vector<16x8xf32>
    %cst_95 = arith.constant dense<0.000000e+00> : vector<16x8xf32>
    %92 = tpu.matmul %62, %85, %cst_95 {dimension_numbers = #tpu.dot_dimension_numbers<[1], [0], [0], [1], [0, 0, 1, 1], [], []>} : vector<16x16xf32>, vector<16x8xf32>, vector<16x8xf32> -> vector<16x8xf32>
    %93 = arith.addf %82, %92 : vector<16x8xf32>
    %94 = arith.addf %93, %88 : vector<16x8xf32>
    %cst_96 = arith.constant dense<0.000000e+00> : vector<16x8xf32>
    %95 = tpu.matmul %63, %91, %cst_96 {dimension_numbers = #tpu.dot_dimension_numbers<[1], [0], [0], [1], [0, 0, 1, 1], [], []>} : vector<16x16xf32>, vector<16x8xf32>, vector<16x8xf32> -> vector<16x8xf32>
    %96 = arith.addf %94, %95 : vector<16x8xf32>
    %cst_97 = arith.constant 0.000000e+00 : f32
    %97 = vector.broadcast %cst_97 : f32 to vector<16x8xf32>
    %98 = arith.maximumf %96, %97 : vector<16x8xf32>
    %c0_98 = arith.constant 0 : index
    %c0_99 = arith.constant 0 : index
    %99 = vector.load %arg19[%c0_98, %c0_99] : memref<1x8xf32, #tpu.memory_space<vmem>>, vector<1x8xf32>
    %100 = vector.shape_cast %99 : vector<1x8xf32> to vector<1x8xf32>
    %101 = vector.broadcast %100 : vector<1x8xf32> to vector<16x8xf32>
    %c0_100 = arith.constant 0 : index
    %c0_101 = arith.constant 0 : index
    %c0_102 = arith.constant 0 : index
    %102 = vector.load %arg18[%c0_100, %c0_101, %c0_102] : memref<3x8x8xf32, #tpu.memory_space<vmem>>, vector<1x8x8xf32>
    %103 = vector.shape_cast %102 : vector<1x8x8xf32> to vector<8x8xf32>
    %cst_103 = arith.constant dense<0.000000e+00> : vector<16x8xf32>
    %104 = tpu.matmul %98, %103, %cst_103 {dimension_numbers = #tpu.dot_dimension_numbers<[1], [0], [0], [1], [0, 0, 1, 1], [], []>} : vector<16x8xf32>, vector<8x8xf32>, vector<16x8xf32> -> vector<16x8xf32>
    %c1_104 = arith.constant 1 : index
    %c0_105 = arith.constant 0 : index
    %c0_106 = arith.constant 0 : index
    %105 = vector.load %arg18[%c1_104, %c0_105, %c0_106] : memref<3x8x8xf32, #tpu.memory_space<vmem>>, vector<1x8x8xf32>
    %106 = vector.shape_cast %105 : vector<1x8x8xf32> to vector<8x8xf32>
    %cst_107 = arith.constant dense<0.000000e+00> : vector<16x8xf32>
    %107 = tpu.matmul %98, %106, %cst_107 {dimension_numbers = #tpu.dot_dimension_numbers<[1], [0], [0], [1], [0, 0, 1, 1], [], []>} : vector<16x8xf32>, vector<8x8xf32>, vector<16x8xf32> -> vector<16x8xf32>
    %c2_108 = arith.constant 2 : index
    %c0_109 = arith.constant 0 : index
    %c0_110 = arith.constant 0 : index
    %108 = vector.load %arg18[%c2_108, %c0_109, %c0_110] : memref<3x8x8xf32, #tpu.memory_space<vmem>>, vector<1x8x8xf32>
    %109 = vector.shape_cast %108 : vector<1x8x8xf32> to vector<8x8xf32>
    %cst_111 = arith.constant dense<0.000000e+00> : vector<16x8xf32>
    %110 = tpu.matmul %98, %109, %cst_111 {dimension_numbers = #tpu.dot_dimension_numbers<[1], [0], [0], [1], [0, 0, 1, 1], [], []>} : vector<16x8xf32>, vector<8x8xf32>, vector<16x8xf32> -> vector<16x8xf32>
    %cst_112 = arith.constant dense<0.000000e+00> : vector<16x8xf32>
    %111 = tpu.matmul %62, %104, %cst_112 {dimension_numbers = #tpu.dot_dimension_numbers<[1], [0], [0], [1], [0, 0, 1, 1], [], []>} : vector<16x16xf32>, vector<16x8xf32>, vector<16x8xf32> -> vector<16x8xf32>
    %112 = arith.addf %101, %111 : vector<16x8xf32>
    %113 = arith.addf %112, %107 : vector<16x8xf32>
    %cst_113 = arith.constant dense<0.000000e+00> : vector<16x8xf32>
    %114 = tpu.matmul %63, %110, %cst_113 {dimension_numbers = #tpu.dot_dimension_numbers<[1], [0], [0], [1], [0, 0, 1, 1], [], []>} : vector<16x16xf32>, vector<16x8xf32>, vector<16x8xf32> -> vector<16x8xf32>
    %115 = arith.addf %113, %114 : vector<16x8xf32>
    %cst_114 = arith.constant 0.000000e+00 : f32
    %116 = vector.broadcast %cst_114 : f32 to vector<16x8xf32>
    %117 = arith.maximumf %115, %116 : vector<16x8xf32>
    %c0_115 = arith.constant 0 : index
    %c0_116 = arith.constant 0 : index
    %118 = vector.load %arg20[%c0_115, %c0_116] : memref<8x2xf32, #tpu.memory_space<vmem>>, vector<8x2xf32>
    %cst_117 = arith.constant dense<0.000000e+00> : vector<16x2xf32>
    %119 = tpu.matmul %117, %118, %cst_117 {dimension_numbers = #tpu.dot_dimension_numbers<[1], [0], [0], [1], [0, 0, 1, 1], [], []>} : vector<16x8xf32>, vector<8x2xf32>, vector<16x2xf32> -> vector<16x2xf32>
    %c0_118 = arith.constant 0 : index
    %c0_119 = arith.constant 0 : index
    %120 = vector.load %arg21[%c0_118, %c0_119] : memref<1x2xf32, #tpu.memory_space<vmem>>, vector<1x2xf32>
    %121 = vector.broadcast %120 : vector<1x2xf32> to vector<16x2xf32>
    %122 = arith.addf %119, %121 : vector<16x2xf32>
    %c0_120 = arith.constant 0 : index
    %c0_121 = arith.constant 0 : index
    %c0_122 = arith.constant 0 : index
    %123 = vector.load %arg22[%c0_120, %c0_121, %c0_122] : memref<1x16x2xf32, #tpu.memory_space<vmem>>, vector<1x16x2xf32>
    %124 = vector.shape_cast %123 : vector<1x16x2xf32> to vector<16x2xf32>
    %125 = vector.shape_cast %122 : vector<16x2xf32> to vector<1x16x2xf32>
    tpu.vector_store %arg22[%c0_120, %c0_121, %c0_122], %125 {strides = array<i32>} : memref<1x16x2xf32, #tpu.memory_space<vmem>>, vector<1x16x2xf32>,
    return
  }
  func.func @transform_0(%arg0: i32) -> (i32, i32, i32) {
    %c0_i32 = arith.constant 0 : i32
    %c0_i32_0 = arith.constant 0 : i32
    %c0_i32_1 = arith.constant 0 : i32
    return %arg0, %c0_i32, %c0_i32_0 : i32, i32, i32
  }
  func.func @transform_1(%arg0: i32) -> (i32, i32) {
    %c0_i32 = arith.constant 0 : i32
    %c0_i32_0 = arith.constant 0 : i32
    %c0_i32_1 = arith.constant 0 : i32
    return %c0_i32, %c0_i32_0 : i32, i32
  }
  func.func @transform_2(%arg0: i32) -> (i32, i32) {
    %c0_i32 = arith.constant 0 : i32
    %c0_i32_0 = arith.constant 0 : i32
    %c0_i32_1 = arith.constant 0 : i32
    return %c0_i32, %c0_i32_0 : i32, i32
  }
  func.func @transform_3(%arg0: i32) -> (i32, i32) {
    %c0_i32 = arith.constant 0 : i32
    %c0_i32_0 = arith.constant 0 : i32
    %c0_i32_1 = arith.constant 0 : i32
    return %c0_i32, %c0_i32_0 : i32, i32
  }
  func.func @transform_4(%arg0: i32) -> (i32, i32, i32) {
    %c0_i32 = arith.constant 0 : i32
    %c0_i32_0 = arith.constant 0 : i32
    %c0_i32_1 = arith.constant 0 : i32
    return %arg0, %c0_i32, %c0_i32_0 : i32, i32, i32
  }
  func.func @transform_5(%arg0: i32) -> (i32, i32, i32) {
    %c0_i32 = arith.constant 0 : i32
    %c0_i32_0 = arith.constant 0 : i32
    %c0_i32_1 = arith.constant 0 : i32
    %c0_i32_2 = arith.constant 0 : i32
    return %c0_i32, %c0_i32_0, %c0_i32_1 : i32, i32, i32
  }
  func.func @transform_6(%arg0: i32) -> (i32, i32, i32) {
    %c0_i32 = arith.constant 0 : i32
    %c0_i32_0 = arith.constant 0 : i32
    %c0_i32_1 = arith.constant 0 : i32
    %c0_i32_2 = arith.constant 0 : i32
    return %c0_i32, %c0_i32_0, %c0_i32_1 : i32, i32, i32
  }
  func.func @transform_7(%arg0: i32) -> (i32, i32) {
    %c0_i32 = arith.constant 0 : i32
    %c0_i32_0 = arith.constant 0 : i32
    %c0_i32_1 = arith.constant 0 : i32
    return %c0_i32, %c0_i32_0 : i32, i32
  }
  func.func @transform_8(%arg0: i32) -> (i32, i32, i32) {
    %c0_i32 = arith.constant 0 : i32
    %c0_i32_0 = arith.constant 0 : i32
    %c0_i32_1 = arith.constant 0 : i32
    %c0_i32_2 = arith.constant 0 : i32
    return %c0_i32, %c0_i32_0, %c0_i32_1 : i32, i32, i32
  }
  func.func @transform_9(%arg0: i32) -> (i32, i32) {
    %c0_i32 = arith.constant 0 : i32
    %c0_i32_0 = arith.constant 0 : i32
    %c0_i32_1 = arith.constant 0 : i32
    return %c0_i32, %c0_i32_0 : i32, i32
  }
  func.func @transform_10(%arg0: i32) -> (i32, i32) {
    %c0_i32 = arith.constant 0 : i32
    %c0_i32_0 = arith.constant 0 : i32
    %c0_i32_1 = arith.constant 0 : i32
    return %c0_i32, %c0_i32_0 : i32, i32
  }
  func.func @transform_11(%arg0: i32) -> (i32, i32) {
    %c0_i32 = arith.constant 0 : i32
    %c0_i32_0 = arith.constant 0 : i32
    %c0_i32_1 = arith.constant 0 : i32
    return %c0_i32, %c0_i32_0 : i32, i32
  }
  func.func @transform_12(%arg0: i32) -> (i32, i32) {
    %c0_i32 = arith.constant 0 : i32
    %c0_i32_0 = arith.constant 0 : i32
    %c0_i32_1 = arith.constant 0 : i32
    return %c0_i32, %c0_i32_0 : i32, i32
  }
  func.func @transform_13(%arg0: i32) -> (i32, i32, i32) {
    %c0_i32 = arith.constant 0 : i32
    %c0_i32_0 = arith.constant 0 : i32
    %c0_i32_1 = arith.constant 0 : i32
    return %arg0, %c0_i32, %c0_i32_0 : i32, i32, i32
  }
  func.func @transform_14(%arg0: i32) -> (i32, i32, i32) {
    %c0_i32 = arith.constant 0 : i32
    %c0_i32_0 = arith.constant 0 : i32
    %c0_i32_1 = arith.constant 0 : i32
    %c0_i32_2 = arith.constant 0 : i32
    return %c0_i32, %c0_i32_0, %c0_i32_1 : i32, i32, i32
  }
  func.func @transform_15(%arg0: i32) -> (i32, i32, i32) {
    %c0_i32 = arith.constant 0 : i32
    %c0_i32_0 = arith.constant 0 : i32
    %c0_i32_1 = arith.constant 0 : i32
    %c0_i32_2 = arith.constant 0 : i32
    return %c0_i32, %c0_i32_0, %c0_i32_1 : i32, i32, i32
  }
  func.func @transform_16(%arg0: i32) -> (i32, i32) {
    %c0_i32 = arith.constant 0 : i32
    %c0_i32_0 = arith.constant 0 : i32
    %c0_i32_1 = arith.constant 0 : i32
    return %c0_i32, %c0_i32_0 : i32, i32
  }
  func.func @transform_17(%arg0: i32) -> (i32, i32, i32) {
    %c0_i32 = arith.constant 0 : i32
    %c0_i32_0 = arith.constant 0 : i32
    %c0_i32_1 = arith.constant 0 : i32
    %c0_i32_2 = arith.constant 0 : i32
    return %c0_i32, %c0_i32_0, %c0_i32_1 : i32, i32, i32
  }
  func.func @transform_18(%arg0: i32) -> (i32, i32) {
    %c0_i32 = arith.constant 0 : i32
    %c0_i32_0 = arith.constant 0 : i32
    %c0_i32_1 = arith.constant 0 : i32
    return %c0_i32, %c0_i32_0 : i32, i32
  }
  func.func @transform_19(%arg0: i32) -> (i32, i32) {
    %c0_i32 = arith.constant 0 : i32
    %c0_i32_0 = arith.constant 0 : i32
    %c0_i32_1 = arith.constant 0 : i32
    return %c0_i32, %c0_i32_0 : i32, i32
  }
  func.func @transform_20(%arg0: i32) -> (i32, i32) {
    %c0_i32 = arith.constant 0 : i32
    %c0_i32_0 = arith.constant 0 : i32
    %c0_i32_1 = arith.constant 0 : i32
    return %c0_i32, %c0_i32_0 : i32, i32
  }
  func.func @transform_21(%arg0: i32) -> (i32, i32, i32) {
    %c0_i32 = arith.constant 0 : i32
    %c0_i32_0 = arith.constant 0 : i32
    %c0_i32_1 = arith.constant 0 : i32
    return %arg0, %c0_i32, %c0_i32_0 : i32, i32, i32
  }
}

</mosaic_0001>

<llo_original>
// kernel: tpu_custom_call.1
$region0: #{tpu_custom_call.1}
  #allocation0 [shape = 'u32[]', space=smem, size = 0x4, offset = 0x4, fixed_abs, tag = 'smem constant byte address 0x4 - core index']
  #allocation1 [shape = 'u32[72,128]{1,0:T(1,128)}', space=vmem, size = 0x9000, scoped, tag = 'internal scratch']
  %s0 = inlined_call_operand.vmem [shape: f32[2,4,32], index: 0, kind: input, shape index: {}]
  %s1 = inlined_call_operand.vmem [shape: f32[8,4], index: 1, kind: input, shape index: {}]
  %s2 = inlined_call_operand.vmem [shape: f32[8,8], index: 2, kind: input, shape index: {}]
  %s3 = inlined_call_operand.hbm [shape: f32[8,8], index: 3, kind: input, shape index: {}]
  %s4 = inlined_call_operand.vmem [shape: f32[2,8,16], index: 4, kind: input, shape index: {}]
  %s5 = inlined_call_operand.vmem [shape: f32[3,16,16], index: 5, kind: input, shape index: {}]
  %s6 = inlined_call_operand.vmem [shape: f32[3,32,16], index: 6, kind: input, shape index: {}]
  %s7 = inlined_call_operand.vmem [shape: f32[1,16], index: 7, kind: input, shape index: {}]
  %s8 = inlined_call_operand.vmem [shape: f32[3,16,16], index: 8, kind: input, shape index: {}]
  %s9 = inlined_call_operand.vmem [shape: f32[1,16], index: 9, kind: input, shape index: {}]
  %s10 = inlined_call_operand.vmem [shape: f32[16,8], index: 10, kind: input, shape index: {}]
  %s11 = inlined_call_operand.vmem [shape: f32[16,16], index: 11, kind: input, shape index: {}]
  %s12 = inlined_call_operand.vmem [shape: f32[16,16], index: 12, kind: input, shape index: {}]
  %s13 = inlined_call_operand.vmem [shape: f32[2,16,8], index: 13, kind: input, shape index: {}]
  %s14 = inlined_call_operand.vmem [shape: f32[3,8,8], index: 14, kind: input, shape index: {}]
  %s15 = inlined_call_operand.vmem [shape: f32[3,16,8], index: 15, kind: input, shape index: {}]
  %s16 = inlined_call_operand.vmem [shape: f32[1,8], index: 16, kind: input, shape index: {}]
  %s17 = inlined_call_operand.vmem [shape: f32[3,8,8], index: 17, kind: input, shape index: {}]
  %s18 = inlined_call_operand.vmem [shape: f32[1,8], index: 18, kind: input, shape index: {}]
  %s19 = inlined_call_operand.vmem [shape: f32[8,2], index: 19, kind: input, shape index: {}]
  %s20 = inlined_call_operand.vmem [shape: f32[1,2], index: 20, kind: input, shape index: {}]
  %s21 = inlined_call_operand.vmem [shape: f32[2,16,2], index: 21, kind: output, shape index: {}]
  %s22 = sld [smem:[#allocation0]]
  $region121: #{tpu_custom_call.1} parent=0
    _
  %s24 = ssub.s32 1, %s22
  %s25 = scalar_select 0, %s24, %s22
  $region1: #{tpu_custom_call.1} parent=0
    #allocation2 [shape = 'u8[4096]{0}', space=vmem, size = 0x1000, scoped, tag = 'input window, operand 3, single buffered']
    #allocation3 [shape = 's32[2]{0}', space=sflag, size = 0x8, scoped, tag = 'scoped memory for tpu_custom_call.1']
    %26 = vsyncpa [#allocation3], 0
    loop: start=0, step=1, limit=4
    $region2: #{tpu_custom_call.1} parent=1 // loop_pre_header
      _
    $region3: #{tpu_custom_call.1} parent=1 // loop_header
      %s28 = sphi 0, %s32
      %p29 = scmp.ge.s32.totalorder %s28, 4
      %s38 = sphi 0, %s40
      %s41 = sphi 0, %s38
      %s42 = sphi 0, %s41
      %s58 = sphi 0, %s42
      %s62 = sphi 0, %s62
      %s64 = sphi 0, %s62
      %s65 = sphi 0, %s64
      %s79 = sphi 0, %s65
      %s83 = sphi 0, %s83
      %s85 = sphi 0, %s83
      %s86 = sphi 0, %s85
      %s100 = sphi 0, %s86
      %s104 = sphi 0, %s104
      %s106 = sphi 0, %s104
      %s107 = sphi 0, %s106
      %s121 = sphi 0, %s107
      %s127 = sphi 0, %s129
      %s130 = sphi 0, %s127
      %s131 = sphi 0, %s130
      %s147 = sphi 0, %s131
      %s151 = sphi 0, %s151
      %s153 = sphi 0, %s151
      %s154 = sphi 0, %s153
      %s168 = sphi 0, %s154
      %s172 = sphi 0, %s172
      %s174 = sphi 0, %s172
      %s175 = sphi 0, %s174
      %s189 = sphi 0, %s175
      %s193 = sphi 0, %s193
      %s195 = sphi 0, %s193
      %s196 = sphi 0, %s195
      %s210 = sphi 0, %s196
      %s214 = sphi 0, %s214
      %s216 = sphi 0, %s214
      %s217 = sphi 0, %s216
      %s231 = sphi 0, %s217
      %s235 = sphi 0, %s235
      %s237 = sphi 0, %s235
      %s238 = sphi 0, %s237
      %s252 = sphi 0, %s238
      %s256 = sphi 0, %s256
      %s258 = sphi 0, %s256
      %s259 = sphi 0, %s258
      %s273 = sphi 0, %s259
      %s277 = sphi 0, %s277
      %s279 = sphi 0, %s277
      %s280 = sphi 0, %s279
      %s294 = sphi 0, %s280
      %s298 = sphi 0, %s298
      %s300 = sphi 0, %s298
      %s301 = sphi 0, %s300
      %s315 = sphi 0, %s301
      %s321 = sphi 0, %s323
      %s324 = sphi 0, %s321
      %s325 = sphi 0, %s324
      %s341 = sphi 0, %s325
      %s345 = sphi 0, %s345
      %s347 = sphi 0, %s345
      %s348 = sphi 0, %s347
      %s362 = sphi 0, %s348
      %s366 = sphi 0, %s366
      %s368 = sphi 0, %s366
      %s369 = sphi 0, %s368
      %s383 = sphi 0, %s369
      %s387 = sphi 0, %s387
      %s389 = sphi 0, %s387
      %s390 = sphi 0, %s389
      %s404 = sphi 0, %s390
      %s408 = sphi 0, %s408
      %s410 = sphi 0, %s408
      %s411 = sphi 0, %s410
      %s425 = sphi 0, %s411
      %s429 = sphi 0, %s429
      %s431 = sphi 0, %s429
      %s432 = sphi 0, %s431
      %s446 = sphi 0, %s432
      %s450 = sphi 0, %s450
      %s452 = sphi 0, %s450
      %s453 = sphi 0, %s452
      %s467 = sphi 0, %s453
      %s471 = sphi 0, %s471
      %s473 = sphi 0, %s471
      %s474 = sphi 0, %s473
      %s488 = sphi 0, %s474
      %s494 = sphi 0, %s496
      %s497 = sphi 0, %s494
      %s498 = sphi 0, %s497
      %s514 = sphi 0, %s498
    $region4: #{tpu_custom_call.1} parent=1 // loop_header_branch
      %31 = sbr.rel (%p29) target = $region8
    $region5: #{tpu_custom_call.1} parent=1 // loop_body
      %s33 = ssub.s32 %s28, 1
      %s34 = ssub.s32 %s28, 2
      %s35 = sadd.s32 %s28, 1
      %s36 = ssub.s32 %s28, %s35
      %p37 = scmp.eq.s32.totalorder %s36, 0
      %s39 = sadd.s32 %s38, 1
      %s40 = scalar_select %p37, %s38, %s39
      %p43 = pneg %p37
      %p44 = scmp.eq.s32.totalorder %s28, 1
      %p45 = por %p43, %p44
      %p46 = scmp.ne.s32.totalorder %s38, %s41
      %p47 = scmp.eq.s32.totalorder %s28, 0
      %p48 = por %p46, %p47
      %p49 = scmp.ne.s32.totalorder %s38, %s41
      %p50 = scmp.eq.s32.totalorder %s33, 1
      %p51 = por %p49, %p50
      %p52 = scmp.ne.s32.totalorder %s41, %s42
      %p53 = scmp.eq.s32.totalorder %s33, 0
      %p54 = por %p52, %p53
      %p55 = scmp.ne.s32.totalorder %s41, %s42
      %p56 = scmp.eq.s32.totalorder %s34, 1
      %p57 = por %p55, %p56
      %p59 = scmp.ne.s32.totalorder %s42, %s58
      %p60 = scmp.eq.s32.totalorder %s34, 0
      %p61 = por %p59, %p60
      %s63 = sadd.s32 %s62, 1
      %p66 = scmp.eq.s32.totalorder %s28, 1
      %p67 = scmp.ne.s32.totalorder %s62, %s64
      %p68 = scmp.eq.s32.totalorder %s28, 0
      %p69 = por %p67, %p68
      %p70 = scmp.ne.s32.totalorder %s62, %s64
      %p71 = scmp.eq.s32.totalorder %s33, 1
      %p72 = por %p70, %p71
      %p73 = scmp.ne.s32.totalorder %s64, %s65
      %p74 = scmp.eq.s32.totalorder %s33, 0
      %p75 = por %p73, %p74
      %p76 = scmp.ne.s32.totalorder %s64, %s65
      %p77 = scmp.eq.s32.totalorder %s34, 1
      %p78 = por %p76, %p77
      %p80 = scmp.ne.s32.totalorder %s65, %s79
      %p81 = scmp.eq.s32.totalorder %s34, 0
      %p82 = por %p80, %p81
      %s84 = sadd.s32 %s83, 1
      %p87 = scmp.eq.s32.totalorder %s28, 1
      %p88 = scmp.ne.s32.totalorder %s83, %s85
      %p89 = scmp.eq.s32.totalorder %s28, 0
      %p90 = por %p88, %p89
      %p91 = scmp.ne.s32.totalorder %s83, %s85
      %p92 = scmp.eq.s32.totalorder %s33, 1
      %p93 = por %p91, %p92
      %p94 = scmp.ne.s32.totalorder %s85, %s86
      %p95 = scmp.eq.s32.totalorder %s33, 0
      %p96 = por %p94, %p95
      %p97 = scmp.ne.s32.totalorder %s85, %s86
      %p98 = scmp.eq.s32.totalorder %s34, 1
      %p99 = por %p97, %p98
      %p101 = scmp.ne.s32.totalorder %s86, %s100
      %p102 = scmp.eq.s32.totalorder %s34, 0
      %p103 = por %p101, %p102
      %s105 = sadd.s32 %s104, 1
      %p108 = scmp.eq.s32.totalorder %s28, 1
      %p109 = scmp.ne.s32.totalorder %s104, %s106
      %p110 = scmp.eq.s32.totalorder %s28, 0
      %p111 = por %p109, %p110
      %p112 = scmp.ne.s32.totalorder %s104, %s106
      %p113 = scmp.eq.s32.totalorder %s33, 1
      %p114 = por %p112, %p113
      %p115 = scmp.ne.s32.totalorder %s106, %s107
      %p116 = scmp.eq.s32.totalorder %s33, 0
      %p117 = por %p115, %p116
      %p118 = scmp.ne.s32.totalorder %s106, %s107
      %p119 = scmp.eq.s32.totalorder %s34, 1
      %p120 = por %p118, %p119
      %p122 = scmp.ne.s32.totalorder %s107, %s121
      %p123 = scmp.eq.s32.totalorder %s34, 0
      %p124 = por %p122, %p123
      %s125 = ssub.s32 %s28, %s35
      %p126 = scmp.eq.s32.totalorder %s125, 0
      %s128 = sadd.s32 %s127, 1
      %s129 = scalar_select %p126, %s127, %s128
      %p132 = pneg %p126
      %p133 = scmp.eq.s32.totalorder %s28, 1
      %p134 = por %p132, %p133
      %p135 = scmp.ne.s32.totalorder %s127, %s130
      %p136 = scmp.eq.s32.totalorder %s28, 0
      %p137 = por %p135, %p136
      %p138 = scmp.ne.s32.totalorder %s127, %s130
      %p139 = scmp.eq.s32.totalorder %s33, 1
      %p140 = por %p138, %p139
      %p141 = scmp.ne.s32.totalorder %s130, %s131
      %p142 = scmp.eq.s32.totalorder %s33, 0
      %p143 = por %p141, %p142
      %p144 = scmp.ne.s32.totalorder %s130, %s131
      %p145 = scmp.eq.s32.totalorder %s34, 1
      %p146 = por %p144, %p145
      %p148 = scmp.ne.s32.totalorder %s131, %s147
      %p149 = scmp.eq.s32.totalorder %s34, 0
      %p150 = por %p148, %p149
      %s152 = sadd.s32 %s151, 1
      %p155 = scmp.eq.s32.totalorder %s28, 1
      %p156 = scmp.ne.s32.totalorder %s151, %s153
      %p157 = scmp.eq.s32.totalorder %s28, 0
      %p158 = por %p156, %p157
      %p159 = scmp.ne.s32.totalorder %s151, %s153
      %p160 = scmp.eq.s32.totalorder %s33, 1
      %p161 = por %p159, %p160
      %p162 = scmp.ne.s32.totalorder %s153, %s154
      %p163 = scmp.eq.s32.totalorder %s33, 0
      %p164 = por %p162, %p163
      %p165 = scmp.ne.s32.totalorder %s153, %s154
      %p166 = scmp.eq.s32.totalorder %s34, 1
      %p167 = por %p165, %p166
      %p169 = scmp.ne.s32.totalorder %s154, %s168
      %p170 = scmp.eq.s32.totalorder %s34, 0
      %p171 = por %p169, %p170
      %s173 = sadd.s32 %s172, 1
      %p176 = scmp.eq.s32.totalorder %s28, 1
      %p177 = scmp.ne.s32.totalorder %s172, %s174
      %p178 = scmp.eq.s32.totalorder %s28, 0
      %p179 = por %p177, %p178
      %p180 = scmp.ne.s32.totalorder %s172, %s174
      %p181 = scmp.eq.s32.totalorder %s33, 1
      %p182 = por %p180, %p181
      %p183 = scmp.ne.s32.totalorder %s174, %s175
      %p184 = scmp.eq.s32.totalorder %s33, 0
      %p185 = por %p183, %p184
      %p186 = scmp.ne.s32.totalorder %s174, %s175
      %p187 = scmp.eq.s32.totalorder %s34, 1
      %p188 = por %p186, %p187
      %p190 = scmp.ne.s32.totalorder %s175, %s189
      %p191 = scmp.eq.s32.totalorder %s34, 0
      %p192 = por %p190, %p191
      %s194 = sadd.s32 %s193, 1
      %p197 = scmp.eq.s32.totalorder %s28, 1
      %p198 = scmp.ne.s32.totalorder %s193, %s195
      %p199 = scmp.eq.s32.totalorder %s28, 0
      %p200 = por %p198, %p199
      %p201 = scmp.ne.s32.totalorder %s193, %s195
      %p202 = scmp.eq.s32.totalorder %s33, 1
      %p203 = por %p201, %p202
      %p204 = scmp.ne.s32.totalorder %s195, %s196
      %p205 = scmp.eq.s32.totalorder %s33, 0
      %p206 = por %p204, %p205
      %p207 = scmp.ne.s32.totalorder %s195, %s196
      %p208 = scmp.eq.s32.totalorder %s34, 1
      %p209 = por %p207, %p208
      %p211 = scmp.ne.s32.totalorder %s196, %s210
      %p212 = scmp.eq.s32.totalorder %s34, 0
      %p213 = por %p211, %p212
      %s215 = sadd.s32 %s214, 1
      %p218 = scmp.eq.s32.totalorder %s28, 1
      %p219 = scmp.ne.s32.totalorder %s214, %s216
      %p220 = scmp.eq.s32.totalorder %s28, 0
      %p221 = por %p219, %p220
      %p222 = scmp.ne.s32.totalorder %s214, %s216
      %p223 = scmp.eq.s32.totalorder %s33, 1
      %p224 = por %p222, %p223
      %p225 = scmp.ne.s32.totalorder %s216, %s217
      %p226 = scmp.eq.s32.totalorder %s33, 0
      %p227 = por %p225, %p226
      %p228 = scmp.ne.s32.totalorder %s216, %s217
      %p229 = scmp.eq.s32.totalorder %s34, 1
      %p230 = por %p228, %p229
      %p232 = scmp.ne.s32.totalorder %s217, %s231
      %p233 = scmp.eq.s32.totalorder %s34, 0
      %p234 = por %p232, %p233
      %s236 = sadd.s32 %s235, 1
      %p239 = scmp.eq.s32.totalorder %s28, 1
      %p240 = scmp.ne.s32.totalorder %s235, %s237
      %p241 = scmp.eq.s32.totalorder %s28, 0
      %p242 = por %p240, %p241
      %p243 = scmp.ne.s32.totalorder %s235, %s237
      %p244 = scmp.eq.s32.totalorder %s33, 1
      %p245 = por %p243, %p244
      %p246 = scmp.ne.s32.totalorder %s237, %s238
      %p247 = scmp.eq.s32.totalorder %s33, 0
      %p248 = por %p246, %p247
      %p249 = scmp.ne.s32.totalorder %s237, %s238
      %p250 = scmp.eq.s32.totalorder %s34, 1
      %p251 = por %p249, %p250
      %p253 = scmp.ne.s32.totalorder %s238, %s252
      %p254 = scmp.eq.s32.totalorder %s34, 0
      %p255 = por %p253, %p254
      %s257 = sadd.s32 %s256, 1
      %p260 = scmp.eq.s32.totalorder %s28, 1
      %p261 = scmp.ne.s32.totalorder %s256, %s258
      %p262 = scmp.eq.s32.totalorder %s28, 0
      %p263 = por %p261, %p262
      %p264 = scmp.ne.s32.totalorder %s256, %s258
      %p265 = scmp.eq.s32.totalorder %s33, 1
      %p266 = por %p264, %p265
      %p267 = scmp.ne.s32.totalorder %s258, %s259
      %p268 = scmp.eq.s32.totalorder %s33, 0
      %p269 = por %p267, %p268
      %p270 = scmp.ne.s32.totalorder %s258, %s259
      %p271 = scmp.eq.s32.totalorder %s34, 1
      %p272 = por %p270, %p271
      %p274 = scmp.ne.s32.totalorder %s259, %s273
      %p275 = scmp.eq.s32.totalorder %s34, 0
      %p276 = por %p274, %p275
      %s278 = sadd.s32 %s277, 1
      %p281 = scmp.eq.s32.totalorder %s28, 1
      %p282 = scmp.ne.s32.totalorder %s277, %s279
      %p283 = scmp.eq.s32.totalorder %s28, 0
      %p284 = por %p282, %p283
      %p285 = scmp.ne.s32.totalorder %s277, %s279
      %p286 = scmp.eq.s32.totalorder %s33, 1
      %p287 = por %p285, %p286
      %p288 = scmp.ne.s32.totalorder %s279, %s280
      %p289 = scmp.eq.s32.totalorder %s33, 0
      %p290 = por %p288, %p289
      %p291 = scmp.ne.s32.totalorder %s279, %s280
      %p292 = scmp.eq.s32.totalorder %s34, 1
      %p293 = por %p291, %p292
      %p295 = scmp.ne.s32.totalorder %s280, %s294
      %p296 = scmp.eq.s32.totalorder %s34, 0
      %p297 = por %p295, %p296
      %s299 = sadd.s32 %s298, 1
      %p302 = scmp.eq.s32.totalorder %s28, 1
      %p303 = scmp.ne.s32.totalorder %s298, %s300
      %p304 = scmp.eq.s32.totalorder %s28, 0
      %p305 = por %p303, %p304
      %p306 = scmp.ne.s32.totalorder %s298, %s300
      %p307 = scmp.eq.s32.totalorder %s33, 1
      %p308 = por %p306, %p307
      %p309 = scmp.ne.s32.totalorder %s300, %s301
      %p310 = scmp.eq.s32.totalorder %s33, 0
      %p311 = por %p309, %p310
      %p312 = scmp.ne.s32.totalorder %s300, %s301
      %p313 = scmp.eq.s32.totalorder %s34, 1
      %p314 = por %p312, %p313
      %p316 = scmp.ne.s32.totalorder %s301, %s315
      %p317 = scmp.eq.s32.totalorder %s34, 0
      %p318 = por %p316, %p317
      %s319 = ssub.s32 %s28, %s35
      %p320 = scmp.eq.s32.totalorder %s319, 0
      %s322 = sadd.s32 %s321, 1
      %s323 = scalar_select %p320, %s321, %s322
      %p326 = pneg %p320
      %p327 = scmp.eq.s32.totalorder %s28, 1
      %p328 = por %p326, %p327
      %p329 = scmp.ne.s32.totalorder %s321, %s324
      %p330 = scmp.eq.s32.totalorder %s28, 0
      %p331 = por %p329, %p330
      %p332 = scmp.ne.s32.totalorder %s321, %s324
      %p333 = scmp.eq.s32.totalorder %s33, 1
      %p334 = por %p332, %p333
      %p335 = scmp.ne.s32.totalorder %s324, %s325
      %p336 = scmp.eq.s32.totalorder %s33, 0
      %p337 = por %p335, %p336
      %p338 = scmp.ne.s32.totalorder %s324, %s325
      %p339 = scmp.eq.s32.totalorder %s34, 1
      %p340 = por %p338, %p339
      %p342 = scmp.ne.s32.totalorder %s325, %s341
      %p343 = scmp.eq.s32.totalorder %s34, 0
      %p344 = por %p342, %p343
      %s346 = sadd.s32 %s345, 1
      %p349 = scmp.eq.s32.totalorder %s28, 1
      %p350 = scmp.ne.s32.totalorder %s345, %s347
      %p351 = scmp.eq.s32.totalorder %s28, 0
      %p352 = por %p350, %p351
      %p353 = scmp.ne.s32.totalorder %s345, %s347
      %p354 = scmp.eq.s32.totalorder %s33, 1
      %p355 = por %p353, %p354
      %p356 = scmp.ne.s32.totalorder %s347, %s348
      %p357 = scmp.eq.s32.totalorder %s33, 0
      %p358 = por %p356, %p357
      %p359 = scmp.ne.s32.totalorder %s347, %s348
      %p360 = scmp.eq.s32.totalorder %s34, 1
      %p361 = por %p359, %p360
      %p363 = scmp.ne.s32.totalorder %s348, %s362
      %p364 = scmp.eq.s32.totalorder %s34, 0
      %p365 = por %p363, %p364
      %s367 = sadd.s32 %s366, 1
      %p370 = scmp.eq.s32.totalorder %s28, 1
      %p371 = scmp.ne.s32.totalorder %s366, %s368
      %p372 = scmp.eq.s32.totalorder %s28, 0
      %p373 = por %p371, %p372
      %p374 = scmp.ne.s32.totalorder %s366, %s368
      %p375 = scmp.eq.s32.totalorder %s33, 1
      %p376 = por %p374, %p375
      %p377 = scmp.ne.s32.totalorder %s368, %s369
      %p378 = scmp.eq.s32.totalorder %s33, 0
      %p379 = por %p377, %p378
      %p380 = scmp.ne.s32.totalorder %s368, %s369
      %p381 = scmp.eq.s32.totalorder %s34, 1
      %p382 = por %p380, %p381
      %p384 = scmp.ne.s32.totalorder %s369, %s383
      %p385 = scmp.eq.s32.totalorder %s34, 0
      %p386 = por %p384, %p385
      %s388 = sadd.s32 %s387, 1
      %p391 = scmp.eq.s32.totalorder %s28, 1
      %p392 = scmp.ne.s32.totalorder %s387, %s389
      %p393 = scmp.eq.s32.totalorder %s28, 0
      %p394 = por %p392, %p393
      %p395 = scmp.ne.s32.totalorder %s387, %s389
      %p396 = scmp.eq.s32.totalorder %s33, 1
      %p397 = por %p395, %p396
      %p398 = scmp.ne.s32.totalorder %s389, %s390
      %p399 = scmp.eq.s32.totalorder %s33, 0
      %p400 = por %p398, %p399
      %p401 = scmp.ne.s32.totalorder %s389, %s390
      %p402 = scmp.eq.s32.totalorder %s34, 1
      %p403 = por %p401, %p402
      %p405 = scmp.ne.s32.totalorder %s390, %s404
      %p406 = scmp.eq.s32.totalorder %s34, 0
      %p407 = por %p405, %p406
      %s409 = sadd.s32 %s408, 1
      %p412 = scmp.eq.s32.totalorder %s28, 1
      %p413 = scmp.ne.s32.totalorder %s408, %s410
      %p414 = scmp.eq.s32.totalorder %s28, 0
      %p415 = por %p413, %p414
      %p416 = scmp.ne.s32.totalorder %s408, %s410
      %p417 = scmp.eq.s32.totalorder %s33, 1
      %p418 = por %p416, %p417
      %p419 = scmp.ne.s32.totalorder %s410, %s411
      %p420 = scmp.eq.s32.totalorder %s33, 0
      %p421 = por %p419, %p420
      %p422 = scmp.ne.s32.totalorder %s410, %s411
      %p423 = scmp.eq.s32.totalorder %s34, 1
      %p424 = por %p422, %p423
      %p426 = scmp.ne.s32.totalorder %s411, %s425
      %p427 = scmp.eq.s32.totalorder %s34, 0
      %p428 = por %p426, %p427
      %s430 = sadd.s32 %s429, 1
      %p433 = scmp.eq.s32.totalorder %s28, 1
      %p434 = scmp.ne.s32.totalorder %s429, %s431
      %p435 = scmp.eq.s32.totalorder %s28, 0
      %p436 = por %p434, %p435
      %p437 = scmp.ne.s32.totalorder %s429, %s431
      %p438 = scmp.eq.s32.totalorder %s33, 1
      %p439 = por %p437, %p438
      %p440 = scmp.ne.s32.totalorder %s431, %s432
      %p441 = scmp.eq.s32.totalorder %s33, 0
      %p442 = por %p440, %p441
      %p443 = scmp.ne.s32.totalorder %s431, %s432
      %p444 = scmp.eq.s32.totalorder %s34, 1
      %p445 = por %p443, %p444
      %p447 = scmp.ne.s32.totalorder %s432, %s446
      %p448 = scmp.eq.s32.totalorder %s34, 0
      %p449 = por %p447, %p448
      %s451 = sadd.s32 %s450, 1
      %p454 = scmp.eq.s32.totalorder %s28, 1
      %p455 = scmp.ne.s32.totalorder %s450, %s452
      %p456 = scmp.eq.s32.totalorder %s28, 0
      %p457 = por %p455, %p456
      %p458 = scmp.ne.s32.totalorder %s450, %s452
      %p459 = scmp.eq.s32.totalorder %s33, 1
      %p460 = por %p458, %p459
      %p461 = scmp.ne.s32.totalorder %s452, %s453
      %p462 = scmp.eq.s32.totalorder %s33, 0
      %p463 = por %p461, %p462
      %p464 = scmp.ne.s32.totalorder %s452, %s453
      %p465 = scmp.eq.s32.totalorder %s34, 1
      %p466 = por %p464, %p465
      %p468 = scmp.ne.s32.totalorder %s453, %s467
      %p469 = scmp.eq.s32.totalorder %s34, 0
      %p470 = por %p468, %p469
      %s472 = sadd.s32 %s471, 1
      %p475 = scmp.eq.s32.totalorder %s28, 1
      %p476 = scmp.ne.s32.totalorder %s471, %s473
      %p477 = scmp.eq.s32.totalorder %s28, 0
      %p478 = por %p476, %p477
      %p479 = scmp.ne.s32.totalorder %s471, %s473
      %p480 = scmp.eq.s32.totalorder %s33, 1
      %p481 = por %p479, %p480
      %p482 = scmp.ne.s32.totalorder %s473, %s474
      %p483 = scmp.eq.s32.totalorder %s33, 0
      %p484 = por %p482, %p483
      %p485 = scmp.ne.s32.totalorder %s473, %s474
      %p486 = scmp.eq.s32.totalorder %s34, 1
      %p487 = por %p485, %p486
      %p489 = scmp.ne.s32.totalorder %s474, %s488
      %p490 = scmp.eq.s32.totalorder %s34, 0
      %p491 = por %p489, %p490
      %s492 = ssub.s32 %s28, %s35
      %p493 = scmp.eq.s32.totalorder %s492, 0
      %s495 = sadd.s32 %s494, 1
      %s496 = scalar_select %p493, %s494, %s495
      %p499 = pneg %p493
      %p500 = scmp.eq.s32.totalorder %s28, 1
      %p501 = por %p499, %p500
      %p502 = scmp.ne.s32.totalorder %s494, %s497
      %p503 = scmp.eq.s32.totalorder %s28, 0
      %p504 = por %p502, %p503
      %p505 = scmp.ne.s32.totalorder %s494, %s497
      %p506 = scmp.eq.s32.totalorder %s33, 1
      %p507 = por %p505, %p506
      %p508 = scmp.ne.s32.totalorder %s497, %s498
      %p509 = scmp.eq.s32.totalorder %s33, 0
      %p510 = por %p508, %p509
      %p511 = scmp.ne.s32.totalorder %s497, %s498
      %p512 = scmp.eq.s32.totalorder %s34, 1
      %p513 = por %p511, %p512
      %p515 = scmp.ne.s32.totalorder %s498, %s514
      %p516 = scmp.eq.s32.totalorder %s34, 0
      %p517 = por %p515, %p516
      %p518 = scmp.le.s32.totalorder 1, %s28
      %p519 = scmp.lt.s32.totalorder %s28, 3
      %p520 = pnand %p518, %p519
      %p521 = pneg %p520
      // Predicated region
      $region9: #{tpu_custom_call.1} parent=5 // pred_check
        _
      $region10: #{tpu_custom_call.1} parent=5 // pred_check_branch
        %523 = sbr.rel (%p520) target = $region12
      $region11: #{tpu_custom_call.1} parent=5 // pred_region
        %s524 = ssub.s32 %s28, 1
        // Predicated region
        $region13: #{tpu_custom_call.1} parent=11 // pred_check
          %p525 = pneg %p75
        $region14: #{tpu_custom_call.1} parent=11 // pred_check_branch
          %527 = sbr.rel (%p525) target = $region16
        $region15: #{tpu_custom_call.1} parent=11 // pred_region
          _
        $region16: #{tpu_custom_call.1} parent=11 // pred_fallthru
          _
        // Predicated region
        $region17: #{tpu_custom_call.1} parent=11 // pred_check
          %p528 = pneg %p96
        $region18: #{tpu_custom_call.1} parent=11 // pred_check_branch
          %530 = sbr.rel (%p528) target = $region20
        $region19: #{tpu_custom_call.1} parent=11 // pred_region
          _
        $region20: #{tpu_custom_call.1} parent=11 // pred_fallthru
          _
        // Predicated region
        $region21: #{tpu_custom_call.1} parent=11 // pred_check
          %p531 = pneg %p117
        $region22: #{tpu_custom_call.1} parent=11 // pred_check_branch
          %533 = sbr.rel (%p531) target = $region24
        $region23: #{tpu_custom_call.1} parent=11 // pred_region
          %535 = vsyncadd [#allocation3], 0
          %s537 = sshll.u32 %s3, 4
          %s538 = int_to_ptr.hbm [resolvable:$true] %s537
          %s539 = sshll.u32 [#allocation2], 4
          %s540 = int_to_ptr.vmem [resolvable:$true] %s539
          %542 = dma.hbm_to_vmem [thread:$0]  %s538, 128, %s540, [#allocation3]
        $region24: #{tpu_custom_call.1} parent=11 // pred_fallthru
          _
        // Predicated region
        $region25: #{tpu_custom_call.1} parent=11 // pred_check
          %p543 = pneg %p164
        $region26: #{tpu_custom_call.1} parent=11 // pred_check_branch
          %545 = sbr.rel (%p543) target = $region28
        $region27: #{tpu_custom_call.1} parent=11 // pred_region
          _
        $region28: #{tpu_custom_call.1} parent=11 // pred_fallthru
          _
        // Predicated region
        $region29: #{tpu_custom_call.1} parent=11 // pred_check
          %p546 = pneg %p185
        $region30: #{tpu_custom_call.1} parent=11 // pred_check_branch
          %548 = sbr.rel (%p546) target = $region32
        $region31: #{tpu_custom_call.1} parent=11 // pred_region
          _
        $region32: #{tpu_custom_call.1} parent=11 // pred_fallthru
          _
        // Predicated region
        $region33: #{tpu_custom_call.1} parent=11 // pred_check
          %p549 = pneg %p206
        $region34: #{tpu_custom_call.1} parent=11 // pred_check_branch
          %551 = sbr.rel (%p549) target = $region36
        $region35: #{tpu_custom_call.1} parent=11 // pred_region
          _
        $region36: #{tpu_custom_call.1} parent=11 // pred_fallthru
          _
        // Predicated region
        $region37: #{tpu_custom_call.1} parent=11 // pred_check
          %p552 = pneg %p227
        $region38: #{tpu_custom_call.1} parent=11 // pred_check_branch
          %554 = sbr.rel (%p552) target = $region40
        $region39: #{tpu_custom_call.1} parent=11 // pred_region
          _
        $region40: #{tpu_custom_call.1} parent=11 // pred_fallthru
          _
        // Predicated region
        $region41: #{tpu_custom_call.1} parent=11 // pred_check
          %p555 = pneg %p248
        $region42: #{tpu_custom_call.1} parent=11 // pred_check_branch
          %557 = sbr.rel (%p555) target = $region44
        $region43: #{tpu_custom_call.1} parent=11 // pred_region
          _
        $region44: #{tpu_custom_call.1} parent=11 // pred_fallthru
          _
        // Predicated region
        $region45: #{tpu_custom_call.1} parent=11 // pred_check
          %p558 = pneg %p269
        $region46: #{tpu_custom_call.1} parent=11 // pred_check_branch
          %560 = sbr.rel (%p558) target = $region48
        $region47: #{tpu_custom_call.1} parent=11 // pred_region
          _
        $region48: #{tpu_custom_call.1} parent=11 // pred_fallthru
          _
        // Predicated region
        $region49: #{tpu_custom_call.1} parent=11 // pred_check
          %p561 = pneg %p290
        $region50: #{tpu_custom_call.1} parent=11 // pred_check_branch
          %563 = sbr.rel (%p561) target = $region52
        $region51: #{tpu_custom_call.1} parent=11 // pred_region
          _
        $region52: #{tpu_custom_call.1} parent=11 // pred_fallthru
          _
        // Predicated region
        $region53: #{tpu_custom_call.1} parent=11 // pred_check
          %p564 = pneg %p311
        $region54: #{tpu_custom_call.1} parent=11 // pred_check_branch
          %566 = sbr.rel (%p564) target = $region56
        $region55: #{tpu_custom_call.1} parent=11 // pred_region
          _
        $region56: #{tpu_custom_call.1} parent=11 // pred_fallthru
          _
        // Predicated region
        $region57: #{tpu_custom_call.1} parent=11 // pred_check
          %p567 = pneg %p358
        $region58: #{tpu_custom_call.1} parent=11 // pred_check_branch
          %569 = sbr.rel (%p567) target = $region60
        $region59: #{tpu_custom_call.1} parent=11 // pred_region
          _
        $region60: #{tpu_custom_call.1} parent=11 // pred_fallthru
          _
        // Predicated region
        $region61: #{tpu_custom_call.1} parent=11 // pred_check
          %p570 = pneg %p379
        $region62: #{tpu_custom_call.1} parent=11 // pred_check_branch
          %572 = sbr.rel (%p570) target = $region64
        $region63: #{tpu_custom_call.1} parent=11 // pred_region
          _
        $region64: #{tpu_custom_call.1} parent=11 // pred_fallthru
          _
        // Predicated region
        $region65: #{tpu_custom_call.1} parent=11 // pred_check
          %p573 = pneg %p400
        $region66: #{tpu_custom_call.1} parent=11 // pred_check_branch
          %575 = sbr.rel (%p573) target = $region68
        $region67: #{tpu_custom_call.1} parent=11 // pred_region
          _
        $region68: #{tpu_custom_call.1} parent=11 // pred_fallthru
          _
        // Predicated region
        $region69: #{tpu_custom_call.1} parent=11 // pred_check
          %p576 = pneg %p421
        $region70: #{tpu_custom_call.1} parent=11 // pred_check_branch
          %578 = sbr.rel (%p576) target = $region72
        $region71: #{tpu_custom_call.1} parent=11 // pred_region
          _
        $region72: #{tpu_custom_call.1} parent=11 // pred_fallthru
          _
        // Predicated region
        $region73: #{tpu_custom_call.1} parent=11 // pred_check
          %p579 = pneg %p442
        $region74: #{tpu_custom_call.1} parent=11 // pred_check_branch
          %581 = sbr.rel (%p579) target = $region76
        $region75: #{tpu_custom_call.1} parent=11 // pred_region
          _
        $region76: #{tpu_custom_call.1} parent=11 // pred_fallthru
          _
        // Predicated region
        $region77: #{tpu_custom_call.1} parent=11 // pred_check
          %p582 = pneg %p463
        $region78: #{tpu_custom_call.1} parent=11 // pred_check_branch
          %584 = sbr.rel (%p582) target = $region80
        $region79: #{tpu_custom_call.1} parent=11 // pred_region
          _
        $region80: #{tpu_custom_call.1} parent=11 // pred_fallthru
          _
        // Predicated region
        $region81: #{tpu_custom_call.1} parent=11 // pred_check
          %p585 = pneg %p484
        $region82: #{tpu_custom_call.1} parent=11 // pred_check_branch
          %587 = sbr.rel (%p585) target = $region84
        $region83: #{tpu_custom_call.1} parent=11 // pred_region
          _
        $region84: #{tpu_custom_call.1} parent=11 // pred_fallthru
          _
      $region12: #{tpu_custom_call.1} parent=5 // pred_fallthru
        _
      %p588 = scmp.lt.s32.totalorder %s28, 2
      // Predicated region
      $region85: #{tpu_custom_call.1} parent=5 // pred_check
        %p589 = pneg %p588
      $region86: #{tpu_custom_call.1} parent=5 // pred_check_branch
        %591 = sbr.rel (%p589) target = $region88
      $region87: #{tpu_custom_call.1} parent=5 // pred_region
        // Predicated region
        $region89: #{tpu_custom_call.1} parent=87 // pred_check
          %p592 = pneg %p48
        $region90: #{tpu_custom_call.1} parent=87 // pred_check_branch
          %594 = sbr.rel (%p592) target = $region92
        $region91: #{tpu_custom_call.1} parent=87 // pred_region
          %p595 = scmp.lt.s32.totalorder %s28, 1
          %s596 = scalar_select %p595, %s28, 1
          %s597 = smul.addr %s596, 4
          %s598 = scalar_lea.vmem %s0, %s597
        $region92: #{tpu_custom_call.1} parent=87 // pred_fallthru
          _
        // Predicated region
        $region93: #{tpu_custom_call.1} parent=87 // pred_check
          %p599 = pneg %p137
        $region94: #{tpu_custom_call.1} parent=87 // pred_check_branch
          %601 = sbr.rel (%p599) target = $region96
        $region95: #{tpu_custom_call.1} parent=87 // pred_region
          %p602 = scmp.lt.s32.totalorder %s28, 1
          %s603 = scalar_select %p602, %s28, 1
          %s604 = smul.addr %s603, 8
          %s605 = scalar_lea.vmem %s4, %s604
        $region96: #{tpu_custom_call.1} parent=87 // pred_fallthru
          _
        // Predicated region
        $region97: #{tpu_custom_call.1} parent=87 // pred_check
          %p606 = pneg %p331
        $region98: #{tpu_custom_call.1} parent=87 // pred_check_branch
          %608 = sbr.rel (%p606) target = $region100
        $region99: #{tpu_custom_call.1} parent=87 // pred_region
          %p609 = scmp.lt.s32.totalorder %s28, 1
          %s610 = scalar_select %p609, %s28, 1
          %s611 = smul.addr %s610, 2
          %s612 = smul.addr %s611, 8
          %s613 = scalar_lea.vmem %s13, %s612
        $region100: #{tpu_custom_call.1} parent=87 // pred_fallthru
          _
      $region88: #{tpu_custom_call.1} parent=5 // pred_fallthru
        _
      %p614 = scmp.le.s32.totalorder 1, %s28
      %p615 = scmp.lt.s32.totalorder %s28, 3
      %p616 = pnand %p614, %p615
      %p617 = pneg %p616
      // Predicated region
      $region101: #{tpu_custom_call.1} parent=5 // pred_check
        _
      $region102: #{tpu_custom_call.1} parent=5 // pred_check_branch
        %619 = sbr.rel (%p616) target = $region104
      $region103: #{tpu_custom_call.1} parent=5 // pred_region
        %s620 = ssub.s32 %s28, 1
        // Predicated region
        $region105: #{tpu_custom_call.1} parent=103 // pred_check
          %p621 = pneg %p117
        $region106: #{tpu_custom_call.1} parent=103 // pred_check_branch
          %623 = sbr.rel (%p621) target = $region108
        $region107: #{tpu_custom_call.1} parent=103 // pred_region
          %625 = dma.done [#allocation3], 128
        $region108: #{tpu_custom_call.1} parent=103 // pred_fallthru
          _
        %p626 = scmp.lt.s32.totalorder %s33, 1
        %s627 = scalar_select %p626, %s33, 1
        %s628 = smul.addr %s627, 4
        %s629 = scalar_lea.vmem %s0, %s628
        %p630 = pneg %p54
        %p631 = pneg %p51
        %p632 = pneg %p75
        %p633 = pneg %p72
        %p634 = pneg %p96
        %p635 = pneg %p93
        %p636 = pneg %p117
        %p637 = pneg %p114
        %p638 = scmp.lt.s32.totalorder %s33, 1
        %s639 = scalar_select %p638, %s33, 1
        %s640 = smul.addr %s639, 8
        %s641 = scalar_lea.vmem %s4, %s640
        %p642 = pneg %p143
        %p643 = pneg %p140
        %p644 = pneg %p164
        %p645 = pneg %p161
        %p646 = pneg %p185
        %p647 = pneg %p182
        %p648 = pneg %p206
        %p649 = pneg %p203
        %p650 = pneg %p227
        %p651 = pneg %p224
        %p652 = pneg %p248
        %p653 = pneg %p245
        %p654 = pneg %p269
        %p655 = pneg %p266
        %p656 = pneg %p290
        %p657 = pneg %p287
        %p658 = pneg %p311
        %p659 = pneg %p308
        %p660 = scmp.lt.s32.totalorder %s33, 1
        %s661 = scalar_select %p660, %s33, 1
        %s662 = smul.addr %s661, 2
        %s663 = smul.addr %s662, 8
        %s664 = scalar_lea.vmem %s13, %s663
        %p665 = pneg %p337
        %p666 = pneg %p334
        %p667 = pneg %p358
        %p668 = pneg %p355
        %p669 = pneg %p379
        %p670 = pneg %p376
        %p671 = pneg %p400
        %p672 = pneg %p397
        %p673 = pneg %p421
        %p674 = pneg %p418
        %p675 = pneg %p442
        %p676 = pneg %p439
        %p677 = pneg %p463
        %p678 = pneg %p460
        %p679 = pneg %p484
        %p680 = pneg %p481
        %p681 = pneg %p510
        %p682 = pneg %p507
        %p683 = scmp.lt.s32.totalorder %s33, 1
        %s684 = scalar_select %p683, %s33, 1
        %s685 = smul.addr %s684, 2
        %s686 = smul.addr %s685, 8
        %s687 = scalar_lea.vmem %s21, %s686
        %p688 = scmp.lt.s32.totalorder %s33, 1
        %s689 = scalar_select %p688, %s33, 1
        %s690 = smul.addr %s689, 4
        %s691 = scalar_lea.vmem %s0, %s690
        %p692 = scmp.lt.s32.totalorder %s33, 1
        %s693 = scalar_select %p692, %s33, 1
        %s694 = smul.addr %s693, 8
        %s695 = scalar_lea.vmem %s4, %s694
        %p696 = scmp.lt.s32.totalorder %s33, 1
        %s697 = scalar_select %p696, %s33, 1
        %s698 = smul.addr %s697, 2
        %s699 = smul.addr %s698, 8
        %s700 = scalar_lea.vmem %s13, %s699
        %p701 = scmp.lt.s32.totalorder %s33, 1
        %s702 = scalar_select %p701, %s33, 1
        %s703 = smul.addr %s702, 2
        %s704 = smul.addr %s703, 8
        %s705 = scalar_lea.vmem %s21, %s704
        %v706 = vld [vmem:[%s691] sm:$0xf]
        %v707 = vld [vmem:[%s695] sm:$0xff]
        %v708 = vld [vmem:[%s2] sm:$0xff]
        %v709 = vld [vmem:[#allocation2] sm:$0xff]
        %v710 = vld [vmem:[%s1] sm:$0xff]
        %vm711 = vcmask 31744
        %v713 = vsel %vm711, %v710, 0
        %vm715 = vcmask 1043456
        %v717 = vsel %vm715, %v706, 0
        %719 = vmatpush.msra.mxu0 0.0
        %720 = vmatpush.msra.mxu0 0.0
        %721 = vmatpush.msra.mxu0 0.0
        %722 = vmatpush.msra.mxu0 0.0
        %723 = vmatpush.msra.mxu0 0.0
        %724 = vmatpush.msra.mxu0 0.0
        %725 = vmatpush.msra.mxu0 0.0
        %726 = vmatpush.msra.mxu0 0.0
        %727 = vmatpush.msra.mxu0 0.0
        %728 = vmatpush.msra.mxu0 0.0
        %729 = vmatpush.msra.mxu0 0.0
        %730 = vmatpush.msra.mxu0 0.0
        %731 = vmatpush.msra.mxu0 0.0
        %732 = vmatpush.msra.mxu0 0.0
        %733 = vmatpush.msra.mxu0 0.0
        %734 = vmatpush.msra.mxu0 %v717
        %735 = vmatmul.f32.gmra.mxu0 %v713
        %v736 = vpop.f32.mrf.mxu0
        %v737 = vadd.f32 0.0, %v736
        %738 = vdwg.mxu0
        %v739 = vld [vmem:[%s7] sm:$0x1]
        %v741 = vperm.slane %v739, 0
        %v743 = vld [vmem:[%s5] sm:$0xff]
        %v744 = vld [vmem:[%s5 + $0x8] sm:$0xff]
        %vm745 = vcmask 130048
        %v747 = vsel %vm745, %v707, 0
        %749 = vmatpush.msra.mxu0 0.0
        %750 = vmatpush.msra.mxu0 0.0
        %751 = vmatpush.msra.mxu0 0.0
        %752 = vmatpush.msra.mxu0 0.0
        %753 = vmatpush.msra.mxu0 0.0
        %754 = vmatpush.msra.mxu0 0.0
        %755 = vmatpush.msra.mxu0 0.0
        %756 = vmatpush.msra.mxu0 0.0
        %757 = vmatpush.msra.mxu0 0.0
        %758 = vmatpush.msra.mxu0 0.0
        %759 = vmatpush.msra.mxu0 0.0
        %760 = vmatpush.msra.mxu0 0.0
        %761 = vmatpush.msra.mxu0 0.0
        %762 = vmatpush.msra.mxu0 0.0
        %763 = vmatpush.msra.mxu0 %v744
        %764 = vmatpush.msra.mxu0 %v743
        %765 = vmatmul.f32.gmra.mxu0 %v747
        %v766 = vpop.f32.mrf.mxu0
        %v767 = vadd.f32 0.0, %v766
        %768 = vdwg.mxu0
        %s769 = scalar_lea.vmem %s5, 16
        %v770 = vld [vmem:[%s769] sm:$0xff]
        %v771 = vld [vmem:[%s769 + $0x8] sm:$0xff]
        %772 = vmatpush.msra.mxu0 0.0
        %773 = vmatpush.msra.mxu0 0.0
        %774 = vmatpush.msra.mxu0 0.0
        %775 = vmatpush.msra.mxu0 0.0
        %776 = vmatpush.msra.mxu0 0.0
        %777 = vmatpush.msra.mxu0 0.0
        %778 = vmatpush.msra.mxu0 0.0
        %779 = vmatpush.msra.mxu0 0.0
        %780 = vmatpush.msra.mxu0 0.0
        %781 = vmatpush.msra.mxu0 0.0
        %782 = vmatpush.msra.mxu0 0.0
        %783 = vmatpush.msra.mxu0 0.0
        %784 = vmatpush.msra.mxu0 0.0
        %785 = vmatpush.msra.mxu0 0.0
        %786 = vmatpush.msra.mxu0 %v771
        %787 = vmatpush.msra.mxu0 %v770
        %788 = vmatmul.f32.gmra.mxu0 %v747
        %v789 = vpop.f32.mrf.mxu0
        %v790 = vadd.f32 0.0, %v789
        %791 = vdwg.mxu0
        %s792 = scalar_lea.vmem %s5, 32
        %v793 = vld [vmem:[%s792] sm:$0xff]
        %v794 = vld [vmem:[%s792 + $0x8] sm:$0xff]
        %795 = vmatpush.msra.mxu0 0.0
        %796 = vmatpush.msra.mxu0 0.0
        %797 = vmatpush.msra.mxu0 0.0
        %798 = vmatpush.msra.mxu0 0.0
        %799 = vmatpush.msra.mxu0 0.0
        %800 = vmatpush.msra.mxu0 0.0
        %801 = vmatpush.msra.mxu0 0.0
        %802 = vmatpush.msra.mxu0 0.0
        %803 = vmatpush.msra.mxu0 0.0
        %804 = vmatpush.msra.mxu0 0.0
        %805 = vmatpush.msra.mxu0 0.0
        %806 = vmatpush.msra.mxu0 0.0
        %807 = vmatpush.msra.mxu0 0.0
        %808 = vmatpush.msra.mxu0 0.0
        %809 = vmatpush.msra.mxu0 %v794
        %810 = vmatpush.msra.mxu0 %v793
        %811 = vmatmul.f32.gmra.mxu0 %v747
        %v812 = vpop.f32.mrf.mxu0
        %v813 = vadd.f32 0.0, %v812
        %814 = vdwg.mxu0
        %vm815 = vcmask 64512
        %v817 = vsel %vm815, %v708, 0
        %819 = vmatpush.msra.mxu0 0.0
        %820 = vmatpush.msra.mxu0 0.0
        %821 = vmatpush.msra.mxu0 0.0
        %822 = vmatpush.msra.mxu0 0.0
        %823 = vmatpush.msra.mxu0 0.0
        %824 = vmatpush.msra.mxu0 0.0
        %825 = vmatpush.msra.mxu0 0.0
        %826 = vmatpush.msra.mxu0 0.0
        %827 = vmatpush.msra.mxu0 0.0
        %828 = vmatpush.msra.mxu0 0.0
        %829 = vmatpush.msra.mxu0 0.0
        %830 = vmatpush.msra.mxu0 0.0
        %831 = vmatpush.msra.mxu0 0.0
        %832 = vmatpush.msra.mxu0 0.0
        %833 = vmatpush.msra.mxu0 0.0
        %834 = vmatpush.msra.mxu0 %v767
        %835 = vmatmul.f32.gmra.mxu0 %v817
        %v836 = vpop.f32.mrf.mxu0
        %v837 = vadd.f32 0.0, %v836
        %838 = vdwg.mxu0
        %v839 = vadd.f32 %v741, %v837
        %v840 = vadd.f32 %v839, %v790
        %v842 = vsel %vm815, %v709, 0
        %844 = vmatpush.msra.mxu0 0.0
        %845 = vmatpush.msra.mxu0 0.0
        %846 = vmatpush.msra.mxu0 0.0
        %847 = vmatpush.msra.mxu0 0.0
        %848 = vmatpush.msra.mxu0 0.0
        %849 = vmatpush.msra.mxu0 0.0
        %850 = vmatpush.msra.mxu0 0.0
        %851 = vmatpush.msra.mxu0 0.0
        %852 = vmatpush.msra.mxu0 0.0
        %853 = vmatpush.msra.mxu0 0.0
        %854 = vmatpush.msra.mxu0 0.0
        %855 = vmatpush.msra.mxu0 0.0
        %856 = vmatpush.msra.mxu0 0.0
        %857 = vmatpush.msra.mxu0 0.0
        %858 = vmatpush.msra.mxu0 0.0
        %859 = vmatpush.msra.mxu0 %v813
        %860 = vmatmul.f32.gmra.mxu0 %v842
        %v861 = vpop.f32.mrf.mxu0
        %v862 = vadd.f32 0.0, %v861
        %863 = vdwg.mxu0
        %v864 = vadd.f32 %v840, %v862
        %v865 = vld [vmem:[%s6] sm:$0xff]
        %v866 = vld [vmem:[%s6 + $0x8] sm:$0xff]
        %v867 = vld [vmem:[%s6 + $0x10] sm:$0xff]
        %v868 = vld [vmem:[%s6 + $0x18] sm:$0xff]
        %vm869 = vcmask 261120
        %v871 = vsel %vm869, %v737, 0
        %873 = vmatpush.msra.mxu0 0.0
        %874 = vmatpush.msra.mxu0 0.0
        %875 = vmatpush.msra.mxu0 0.0
        %876 = vmatpush.msra.mxu0 0.0
        %877 = vmatpush.msra.mxu0 0.0
        %878 = vmatpush.msra.mxu0 0.0
        %879 = vmatpush.msra.mxu0 0.0
        %880 = vmatpush.msra.mxu0 0.0
        %881 = vmatpush.msra.mxu0 0.0
        %882 = vmatpush.msra.mxu0 0.0
        %883 = vmatpush.msra.mxu0 0.0
        %884 = vmatpush.msra.mxu0 0.0
        %885 = vmatpush.msra.mxu0 %v868
        %886 = vmatpush.msra.mxu0 %v867
        %887 = vmatpush.msra.mxu0 %v866
        %888 = vmatpush.msra.mxu0 %v865
        %889 = vmatmul.f32.gmra.mxu0 %v871
        %v890 = vpop.f32.mrf.mxu0
        %v891 = vadd.f32 0.0, %v890
        %892 = vdwg.mxu0
        %s893 = scalar_lea.vmem %s6, 32
        %v894 = vld [vmem:[%s893] sm:$0xff]
        %v895 = vld [vmem:[%s893 + $0x8] sm:$0xff]
        %v896 = vld [vmem:[%s893 + $0x10] sm:$0xff]
        %v897 = vld [vmem:[%s893 + $0x18] sm:$0xff]
        %898 = vmatpush.msra.mxu0 0.0
        %899 = vmatpush.msra.mxu0 0.0
        %900 = vmatpush.msra.mxu0 0.0
        %901 = vmatpush.msra.mxu0 0.0
        %902 = vmatpush.msra.mxu0 0.0
        %903 = vmatpush.msra.mxu0 0.0
        %904 = vmatpush.msra.mxu0 0.0
        %905 = vmatpush.msra.mxu0 0.0
        %906 = vmatpush.msra.mxu0 0.0
        %907 = vmatpush.msra.mxu0 0.0
        %908 = vmatpush.msra.mxu0 0.0
        %909 = vmatpush.msra.mxu0 0.0
        %910 = vmatpush.msra.mxu0 %v897
        %911 = vmatpush.msra.mxu0 %v896
        %912 = vmatpush.msra.mxu0 %v895
        %913 = vmatpush.msra.mxu0 %v894
        %914 = vmatmul.f32.gmra.mxu0 %v871
        %v915 = vpop.f32.mrf.mxu0
        %v916 = vadd.f32 0.0, %v915
        %917 = vdwg.mxu0
        %s918 = scalar_lea.vmem %s6, 64
        %v919 = vld [vmem:[%s918] sm:$0xff]
        %v920 = vld [vmem:[%s918 + $0x8] sm:$0xff]
        %v921 = vld [vmem:[%s918 + $0x10] sm:$0xff]
        %v922 = vld [vmem:[%s918 + $0x18] sm:$0xff]
        %923 = vmatpush.msra.mxu0 0.0
        %924 = vmatpush.msra.mxu0 0.0
        %925 = vmatpush.msra.mxu0 0.0
        %926 = vmatpush.msra.mxu0 0.0
        %927 = vmatpush.msra.mxu0 0.0
        %928 = vmatpush.msra.mxu0 0.0
        %929 = vmatpush.msra.mxu0 0.0
        %930 = vmatpush.msra.mxu0 0.0
        %931 = vmatpush.msra.mxu0 0.0
        %932 = vmatpush.msra.mxu0 0.0
        %933 = vmatpush.msra.mxu0 0.0
        %934 = vmatpush.msra.mxu0 0.0
        %935 = vmatpush.msra.mxu0 %v922
        %936 = vmatpush.msra.mxu0 %v921
        %937 = vmatpush.msra.mxu0 %v920
        %938 = vmatpush.msra.mxu0 %v919
        %939 = vmatmul.f32.gmra.mxu0 %v871
        %v940 = vpop.f32.mrf.mxu0
        %v941 = vadd.f32 0.0, %v940
        %942 = vdwg.mxu0
        %943 = vmatpush.msra.mxu0 0.0
        %944 = vmatpush.msra.mxu0 0.0
        %945 = vmatpush.msra.mxu0 0.0
        %946 = vmatpush.msra.mxu0 0.0
        %947 = vmatpush.msra.mxu0 0.0
        %948 = vmatpush.msra.mxu0 0.0
        %949 = vmatpush.msra.mxu0 0.0
        %950 = vmatpush.msra.mxu0 0.0
        %951 = vmatpush.msra.mxu0 0.0
        %952 = vmatpush.msra.mxu0 0.0
        %953 = vmatpush.msra.mxu0 0.0
        %954 = vmatpush.msra.mxu0 0.0
        %955 = vmatpush.msra.mxu0 0.0
        %956 = vmatpush.msra.mxu0 0.0
        %957 = vmatpush.msra.mxu0 0.0
        %958 = vmatpush.msra.mxu0 %v891
        %959 = vmatmul.f32.gmra.mxu0 %v817
        %v960 = vpop.f32.mrf.mxu0
        %v961 = vadd.f32 0.0, %v960
        %962 = vdwg.mxu0
        %v963 = vadd.f32 %v864, %v961
        %v964 = vadd.f32 %v963, %v916
        %965 = vmatpush.msra.mxu0 0.0
        %966 = vmatpush.msra.mxu0 0.0
        %967 = vmatpush.msra.mxu0 0.0
        %968 = vmatpush.msra.mxu0 0.0
        %969 = vmatpush.msra.mxu0 0.0
        %970 = vmatpush.msra.mxu0 0.0
        %971 = vmatpush.msra.mxu0 0.0
        %972 = vmatpush.msra.mxu0 0.0
        %973 = vmatpush.msra.mxu0 0.0
        %974 = vmatpush.msra.mxu0 0.0
        %975 = vmatpush.msra.mxu0 0.0
        %976 = vmatpush.msra.mxu0 0.0
        %977 = vmatpush.msra.mxu0 0.0
        %978 = vmatpush.msra.mxu0 0.0
        %979 = vmatpush.msra.mxu0 0.0
        %980 = vmatpush.msra.mxu0 %v941
        %981 = vmatmul.f32.gmra.mxu0 %v842
        %v982 = vpop.f32.mrf.mxu0
        %v983 = vadd.f32 0.0, %v982
        %984 = vdwg.mxu0
        %v985 = vadd.f32 %v964, %v983
        %v986 = vmax.f32 %v985, 0.0
        %v987 = vld [vmem:[%s9] sm:$0x1]
        %v989 = vperm.slane %v987, 0
        %v991 = vld [vmem:[%s8] sm:$0xff]
        %v992 = vld [vmem:[%s8 + $0x8] sm:$0xff]
        %v994 = vsel %vm745, %v986, 0
        %996 = vmatpush.msra.mxu0 0.0
        %997 = vmatpush.msra.mxu0 0.0
        %998 = vmatpush.msra.mxu0 0.0
        %999 = vmatpush.msra.mxu0 0.0
        %1000 = vmatpush.msra.mxu0 0.0
        %1001 = vmatpush.msra.mxu0 0.0
        %1002 = vmatpush.msra.mxu0 0.0
        %1003 = vmatpush.msra.mxu0 0.0
        %1004 = vmatpush.msra.mxu0 0.0
        %1005 = vmatpush.msra.mxu0 0.0
        %1006 = vmatpush.msra.mxu0 0.0
        %1007 = vmatpush.msra.mxu0 0.0
        %1008 = vmatpush.msra.mxu0 0.0
        %1009 = vmatpush.msra.mxu0 0.0
        %1010 = vmatpush.msra.mxu0 %v992
        %1011 = vmatpush.msra.mxu0 %v991
        %1012 = vmatmul.f32.gmra.mxu0 %v994
        %v1013 = vpop.f32.mrf.mxu0
        %v1014 = vadd.f32 0.0, %v1013
        %1015 = vdwg.mxu0
        %s1016 = scalar_lea.vmem %s8, 16
        %v1017 = vld [vmem:[%s1016] sm:$0xff]
        %v1018 = vld [vmem:[%s1016 + $0x8] sm:$0xff]
        %1019 = vmatpush.msra.mxu0 0.0
        %1020 = vmatpush.msra.mxu0 0.0
        %1021 = vmatpush.msra.mxu0 0.0
        %1022 = vmatpush.msra.mxu0 0.0
        %1023 = vmatpush.msra.mxu0 0.0
        %1024 = vmatpush.msra.mxu0 0.0
        %1025 = vmatpush.msra.mxu0 0.0
        %1026 = vmatpush.msra.mxu0 0.0
        %1027 = vmatpush.msra.mxu0 0.0
        %1028 = vmatpush.msra.mxu0 0.0
        %1029 = vmatpush.msra.mxu0 0.0
        %1030 = vmatpush.msra.mxu0 0.0
        %1031 = vmatpush.msra.mxu0 0.0
        %1032 = vmatpush.msra.mxu0 0.0
        %1033 = vmatpush.msra.mxu0 %v1018
        %1034 = vmatpush.msra.mxu0 %v1017
        %1035 = vmatmul.f32.gmra.mxu0 %v994
        %v1036 = vpop.f32.mrf.mxu0
        %v1037 = vadd.f32 0.0, %v1036
        %1038 = vdwg.mxu0
        %s1039 = scalar_lea.vmem %s8, 32
        %v1040 = vld [vmem:[%s1039] sm:$0xff]
        %v1041 = vld [vmem:[%s1039 + $0x8] sm:$0xff]
        %1042 = vmatpush.msra.mxu0 0.0
        %1043 = vmatpush.msra.mxu0 0.0
        %1044 = vmatpush.msra.mxu0 0.0
        %1045 = vmatpush.msra.mxu0 0.0
        %1046 = vmatpush.msra.mxu0 0.0
        %1047 = vmatpush.msra.mxu0 0.0
        %1048 = vmatpush.msra.mxu0 0.0
        %1049 = vmatpush.msra.mxu0 0.0
        %1050 = vmatpush.msra.mxu0 0.0
        %1051 = vmatpush.msra.mxu0 0.0
        %1052 = vmatpush.msra.mxu0 0.0
        %1053 = vmatpush.msra.mxu0 0.0
        %1054 = vmatpush.msra.mxu0 0.0
        %1055 = vmatpush.msra.mxu0 0.0
        %1056 = vmatpush.msra.mxu0 %v1041
        %1057 = vmatpush.msra.mxu0 %v1040
        %1058 = vmatmul.f32.gmra.mxu0 %v994
        %v1059 = vpop.f32.mrf.mxu0
        %v1060 = vadd.f32 0.0, %v1059
        %1061 = vdwg.mxu0
        %1062 = vmatpush.msra.mxu0 0.0
        %1063 = vmatpush.msra.mxu0 0.0
        %1064 = vmatpush.msra.mxu0 0.0
        %1065 = vmatpush.msra.mxu0 0.0
        %1066 = vmatpush.msra.mxu0 0.0
        %1067 = vmatpush.msra.mxu0 0.0
        %1068 = vmatpush.msra.mxu0 0.0
        %1069 = vmatpush.msra.mxu0 0.0
        %1070 = vmatpush.msra.mxu0 0.0
        %1071 = vmatpush.msra.mxu0 0.0
        %1072 = vmatpush.msra.mxu0 0.0
        %1073 = vmatpush.msra.mxu0 0.0
        %1074 = vmatpush.msra.mxu0 0.0
        %1075 = vmatpush.msra.mxu0 0.0
        %1076 = vmatpush.msra.mxu0 0.0
        %1077 = vmatpush.msra.mxu0 %v1014
        %1078 = vmatmul.f32.gmra.mxu0 %v817
        %v1079 = vpop.f32.mrf.mxu0
        %v1080 = vadd.f32 0.0, %v1079
        %1081 = vdwg.mxu0
        %v1082 = vadd.f32 %v989, %v1080
        %v1083 = vadd.f32 %v1082, %v1037
        %1084 = vmatpush.msra.mxu0 0.0
        %1085 = vmatpush.msra.mxu0 0.0
        %1086 = vmatpush.msra.mxu0 0.0
        %1087 = vmatpush.msra.mxu0 0.0
        %1088 = vmatpush.msra.mxu0 0.0
        %1089 = vmatpush.msra.mxu0 0.0
        %1090 = vmatpush.msra.mxu0 0.0
        %1091 = vmatpush.msra.mxu0 0.0
        %1092 = vmatpush.msra.mxu0 0.0
        %1093 = vmatpush.msra.mxu0 0.0
        %1094 = vmatpush.msra.mxu0 0.0
        %1095 = vmatpush.msra.mxu0 0.0
        %1096 = vmatpush.msra.mxu0 0.0
        %1097 = vmatpush.msra.mxu0 0.0
        %1098 = vmatpush.msra.mxu0 0.0
        %1099 = vmatpush.msra.mxu0 %v1060
        %1100 = vmatmul.f32.gmra.mxu0 %v842
        %v1101 = vpop.f32.mrf.mxu0
        %v1102 = vadd.f32 0.0, %v1101
        %1103 = vdwg.mxu0
        %v1104 = vadd.f32 %v1083, %v1102
        %v1105 = vmax.f32 %v1104, 0.0
        %v1106 = vld [vmem:[%s700] sm:$0xff]
        %v1107 = vld [vmem:[%s700 + $0x8] sm:$0xff]
        %v1108 = vld [vmem:[%s11] sm:$0xff]
        %v1109 = vld [vmem:[%s11 + $0x8] sm:$0xff]
        %v1110 = vld [vmem:[%s12] sm:$0xff]
        %v1111 = vld [vmem:[%s12 + $0x8] sm:$0xff]
        %v1112 = vld [vmem:[%s10] sm:$0xff]
        %v1113 = vld [vmem:[%s10 + $0x8] sm:$0xff]
        %v1115 = vsel %vm815, %v1112, 0
        %v1118 = vsel %vm815, %v1113, 0
        %1120 = vmatpush.msra.mxu0 0.0
        %1121 = vmatpush.msra.mxu0 0.0
        %1122 = vmatpush.msra.mxu0 0.0
        %1123 = vmatpush.msra.mxu0 0.0
        %1124 = vmatpush.msra.mxu0 0.0
        %1125 = vmatpush.msra.mxu0 0.0
        %1126 = vmatpush.msra.mxu0 0.0
        %1127 = vmatpush.msra.mxu0 0.0
        %1128 = vmatpush.msra.mxu0 0.0
        %1129 = vmatpush.msra.mxu0 0.0
        %1130 = vmatpush.msra.mxu0 0.0
        %1131 = vmatpush.msra.mxu0 0.0
        %1132 = vmatpush.msra.mxu0 0.0
        %1133 = vmatpush.msra.mxu0 0.0
        %1134 = vmatpush.msra.mxu0 0.0
        %1135 = vmatpush.msra.mxu0 %v1105
        %1136 = vmatmul.f32.gmra.mxu0 %v1115
        %v1137 = vpop.f32.mrf.mxu0
        %v1138 = vadd.f32 0.0, %v1137
        %1139 = vmatmul.f32.gmra.mxu0 %v1118
        %v1140 = vpop.f32.mrf.mxu0
        %v1141 = vadd.f32 0.0, %v1140
        %1142 = vdwg.mxu0
        %v1143 = vld [vmem:[%s16] sm:$0x1]
        %v1145 = vperm.slane %v1143, 0
        %v1147 = vld [vmem:[%s14] sm:$0xff]
        %v1149 = vsel %vm815, %v1106, 0
        %v1152 = vsel %vm815, %v1107, 0
        %1154 = vmatpush.msra.mxu0 0.0
        %1155 = vmatpush.msra.mxu0 0.0
        %1156 = vmatpush.msra.mxu0 0.0
        %1157 = vmatpush.msra.mxu0 0.0
        %1158 = vmatpush.msra.mxu0 0.0
        %1159 = vmatpush.msra.mxu0 0.0
        %1160 = vmatpush.msra.mxu0 0.0
        %1161 = vmatpush.msra.mxu0 0.0
        %1162 = vmatpush.msra.mxu0 0.0
        %1163 = vmatpush.msra.mxu0 0.0
        %1164 = vmatpush.msra.mxu0 0.0
        %1165 = vmatpush.msra.mxu0 0.0
        %1166 = vmatpush.msra.mxu0 0.0
        %1167 = vmatpush.msra.mxu0 0.0
        %1168 = vmatpush.msra.mxu0 0.0
        %1169 = vmatpush.msra.mxu0 %v1147
        %1170 = vmatmul.f32.gmra.mxu0 %v1149
        %v1171 = vpop.f32.mrf.mxu0
        %v1172 = vadd.f32 0.0, %v1171
        %1173 = vmatmul.f32.gmra.mxu0 %v1152
        %v1174 = vpop.f32.mrf.mxu0
        %v1175 = vadd.f32 0.0, %v1174
        %1176 = vdwg.mxu0
        %s1177 = scalar_lea.vmem %s14, 8
        %v1178 = vld [vmem:[%s1177] sm:$0xff]
        %1179 = vmatpush.msra.mxu0 0.0
        %1180 = vmatpush.msra.mxu0 0.0
        %1181 = vmatpush.msra.mxu0 0.0
        %1182 = vmatpush.msra.mxu0 0.0
        %1183 = vmatpush.msra.mxu0 0.0
        %1184 = vmatpush.msra.mxu0 0.0
        %1185 = vmatpush.msra.mxu0 0.0
        %1186 = vmatpush.msra.mxu0 0.0
        %1187 = vmatpush.msra.mxu0 0.0
        %1188 = vmatpush.msra.mxu0 0.0
        %1189 = vmatpush.msra.mxu0 0.0
        %1190 = vmatpush.msra.mxu0 0.0
        %1191 = vmatpush.msra.mxu0 0.0
        %1192 = vmatpush.msra.mxu0 0.0
        %1193 = vmatpush.msra.mxu0 0.0
        %1194 = vmatpush.msra.mxu0 %v1178
        %1195 = vmatmul.f32.gmra.mxu0 %v1149
        %v1196 = vpop.f32.mrf.mxu0
        %v1197 = vadd.f32 0.0, %v1196
        %1198 = vmatmul.f32.gmra.mxu0 %v1152
        %v1199 = vpop.f32.mrf.mxu0
        %v1200 = vadd.f32 0.0, %v1199
        %1201 = vdwg.mxu0
        %s1202 = scalar_lea.vmem %s14, 16
        %v1203 = vld [vmem:[%s1202] sm:$0xff]
        %1204 = vmatpush.msra.mxu0 0.0
        %1205 = vmatpush.msra.mxu0 0.0
        %1206 = vmatpush.msra.mxu0 0.0
        %1207 = vmatpush.msra.mxu0 0.0
        %1208 = vmatpush.msra.mxu0 0.0
        %1209 = vmatpush.msra.mxu0 0.0
        %1210 = vmatpush.msra.mxu0 0.0
        %1211 = vmatpush.msra.mxu0 0.0
        %1212 = vmatpush.msra.mxu0 0.0
        %1213 = vmatpush.msra.mxu0 0.0
        %1214 = vmatpush.msra.mxu0 0.0
        %1215 = vmatpush.msra.mxu0 0.0
        %1216 = vmatpush.msra.mxu0 0.0
        %1217 = vmatpush.msra.mxu0 0.0
        %1218 = vmatpush.msra.mxu0 0.0
        %1219 = vmatpush.msra.mxu0 %v1203
        %1220 = vmatmul.f32.gmra.mxu0 %v1149
        %v1221 = vpop.f32.mrf.mxu0
        %v1222 = vadd.f32 0.0, %v1221
        %1223 = vmatmul.f32.gmra.mxu0 %v1152
        %v1224 = vpop.f32.mrf.mxu0
        %v1225 = vadd.f32 0.0, %v1224
        %1226 = vdwg.mxu0
        %v1228 = vsel %vm745, %v1108, 0
        %v1231 = vsel %vm745, %v1109, 0
        %1233 = vmatpush.msra.mxu0 0.0
        %1234 = vmatpush.msra.mxu0 0.0
        %1235 = vmatpush.msra.mxu0 0.0
        %1236 = vmatpush.msra.mxu0 0.0
        %1237 = vmatpush.msra.mxu0 0.0
        %1238 = vmatpush.msra.mxu0 0.0
        %1239 = vmatpush.msra.mxu0 0.0
        %1240 = vmatpush.msra.mxu0 0.0
        %1241 = vmatpush.msra.mxu0 0.0
        %1242 = vmatpush.msra.mxu0 0.0
        %1243 = vmatpush.msra.mxu0 0.0
        %1244 = vmatpush.msra.mxu0 0.0
        %1245 = vmatpush.msra.mxu0 0.0
        %1246 = vmatpush.msra.mxu0 0.0
        %1247 = vmatpush.msra.mxu0 %v1175
        %1248 = vmatpush.msra.mxu0 %v1172
        %1249 = vmatmul.f32.gmra.mxu0 %v1228
        %v1250 = vpop.f32.mrf.mxu0
        %v1251 = vadd.f32 0.0, %v1250
        %1252 = vmatmul.f32.gmra.mxu0 %v1231
        %v1253 = vpop.f32.mrf.mxu0
        %v1254 = vadd.f32 0.0, %v1253
        %1255 = vdwg.mxu0
        %v1256 = vadd.f32 %v1145, %v1251
        %v1257 = vadd.f32 %v1145, %v1254
        %v1258 = vadd.f32 %v1256, %v1197
        %v1259 = vadd.f32 %v1257, %v1200
        %v1261 = vsel %vm745, %v1110, 0
        %v1264 = vsel %vm745, %v1111, 0
        %1266 = vmatpush.msra.mxu0 0.0
        %1267 = vmatpush.msra.mxu0 0.0
        %1268 = vmatpush.msra.mxu0 0.0
        %1269 = vmatpush.msra.mxu0 0.0
        %1270 = vmatpush.msra.mxu0 0.0
        %1271 = vmatpush.msra.mxu0 0.0
        %1272 = vmatpush.msra.mxu0 0.0
        %1273 = vmatpush.msra.mxu0 0.0
        %1274 = vmatpush.msra.mxu0 0.0
        %1275 = vmatpush.msra.mxu0 0.0
        %1276 = vmatpush.msra.mxu0 0.0
        %1277 = vmatpush.msra.mxu0 0.0
        %1278 = vmatpush.msra.mxu0 0.0
        %1279 = vmatpush.msra.mxu0 0.0
        %1280 = vmatpush.msra.mxu0 %v1225
        %1281 = vmatpush.msra.mxu0 %v1222
        %1282 = vmatmul.f32.gmra.mxu0 %v1261
        %v1283 = vpop.f32.mrf.mxu0
        %v1284 = vadd.f32 0.0, %v1283
        %1285 = vmatmul.f32.gmra.mxu0 %v1264
        %v1286 = vpop.f32.mrf.mxu0
        %v1287 = vadd.f32 0.0, %v1286
        %1288 = vdwg.mxu0
        %v1289 = vadd.f32 %v1258, %v1284
        %v1290 = vadd.f32 %v1259, %v1287
        %v1291 = vld [vmem:[%s15] sm:$0xff]
        %v1292 = vld [vmem:[%s15 + $0x8] sm:$0xff]
        %v1294 = vsel %vm745, %v1138, 0
        %v1297 = vsel %vm745, %v1141, 0
        %1299 = vmatpush.msra.mxu0 0.0
        %1300 = vmatpush.msra.mxu0 0.0
        %1301 = vmatpush.msra.mxu0 0.0
        %1302 = vmatpush.msra.mxu0 0.0
        %1303 = vmatpush.msra.mxu0 0.0
        %1304 = vmatpush.msra.mxu0 0.0
        %1305 = vmatpush.msra.mxu0 0.0
        %1306 = vmatpush.msra.mxu0 0.0
        %1307 = vmatpush.msra.mxu0 0.0
        %1308 = vmatpush.msra.mxu0 0.0
        %1309 = vmatpush.msra.mxu0 0.0
        %1310 = vmatpush.msra.mxu0 0.0
        %1311 = vmatpush.msra.mxu0 0.0
        %1312 = vmatpush.msra.mxu0 0.0
        %1313 = vmatpush.msra.mxu0 %v1292
        %1314 = vmatpush.msra.mxu0 %v1291
        %1315 = vmatmul.f32.gmra.mxu0 %v1294
        %v1316 = vpop.f32.mrf.mxu0
        %v1317 = vadd.f32 0.0, %v1316
        %1318 = vmatmul.f32.gmra.mxu0 %v1297
        %v1319 = vpop.f32.mrf.mxu0
        %v1320 = vadd.f32 0.0, %v1319
        %1321 = vdwg.mxu0
        %s1322 = scalar_lea.vmem %s15, 16
        %v1323 = vld [vmem:[%s1322] sm:$0xff]
        %v1324 = vld [vmem:[%s1322 + $0x8] sm:$0xff]
        %1325 = vmatpush.msra.mxu0 0.0
        %1326 = vmatpush.msra.mxu0 0.0
        %1327 = vmatpush.msra.mxu0 0.0
        %1328 = vmatpush.msra.mxu0 0.0
        %1329 = vmatpush.msra.mxu0 0.0
        %1330 = vmatpush.msra.mxu0 0.0
        %1331 = vmatpush.msra.mxu0 0.0
        %1332 = vmatpush.msra.mxu0 0.0
        %1333 = vmatpush.msra.mxu0 0.0
        %1334 = vmatpush.msra.mxu0 0.0
        %1335 = vmatpush.msra.mxu0 0.0
        %1336 = vmatpush.msra.mxu0 0.0
        %1337 = vmatpush.msra.mxu0 0.0
        %1338 = vmatpush.msra.mxu0 0.0
        %1339 = vmatpush.msra.mxu0 %v1324
        %1340 = vmatpush.msra.mxu0 %v1323
        %1341 = vmatmul.f32.gmra.mxu0 %v1294
        %v1342 = vpop.f32.mrf.mxu0
        %v1343 = vadd.f32 0.0, %v1342
        %1344 = vmatmul.f32.gmra.mxu0 %v1297
        %v1345 = vpop.f32.mrf.mxu0
        %v1346 = vadd.f32 0.0, %v1345
        %1347 = vdwg.mxu0
        %s1348 = scalar_lea.vmem %s15, 32
        %v1349 = vld [vmem:[%s1348] sm:$0xff]
        %v1350 = vld [vmem:[%s1348 + $0x8] sm:$0xff]
        %1351 = vmatpush.msra.mxu0 0.0
        %1352 = vmatpush.msra.mxu0 0.0
        %1353 = vmatpush.msra.mxu0 0.0
        %1354 = vmatpush.msra.mxu0 0.0
        %1355 = vmatpush.msra.mxu0 0.0
        %1356 = vmatpush.msra.mxu0 0.0
        %1357 = vmatpush.msra.mxu0 0.0
        %1358 = vmatpush.msra.mxu0 0.0
        %1359 = vmatpush.msra.mxu0 0.0
        %1360 = vmatpush.msra.mxu0 0.0
        %1361 = vmatpush.msra.mxu0 0.0
        %1362 = vmatpush.msra.mxu0 0.0
        %1363 = vmatpush.msra.mxu0 0.0
        %1364 = vmatpush.msra.mxu0 0.0
        %1365 = vmatpush.msra.mxu0 %v1350
        %1366 = vmatpush.msra.mxu0 %v1349
        %1367 = vmatmul.f32.gmra.mxu0 %v1294
        %v1368 = vpop.f32.mrf.mxu0
        %v1369 = vadd.f32 0.0, %v1368
        %1370 = vmatmul.f32.gmra.mxu0 %v1297
        %v1371 = vpop.f32.mrf.mxu0
        %v1372 = vadd.f32 0.0, %v1371
        %1373 = vdwg.mxu0
        %1374 = vmatpush.msra.mxu0 0.0
        %1375 = vmatpush.msra.mxu0 0.0
        %1376 = vmatpush.msra.mxu0 0.0
        %1377 = vmatpush.msra.mxu0 0.0
        %1378 = vmatpush.msra.mxu0 0.0
        %1379 = vmatpush.msra.mxu0 0.0
        %1380 = vmatpush.msra.mxu0 0.0
        %1381 = vmatpush.msra.mxu0 0.0
        %1382 = vmatpush.msra.mxu0 0.0
        %1383 = vmatpush.msra.mxu0 0.0
        %1384 = vmatpush.msra.mxu0 0.0
        %1385 = vmatpush.msra.mxu0 0.0
        %1386 = vmatpush.msra.mxu0 0.0
        %1387 = vmatpush.msra.mxu0 0.0
        %1388 = vmatpush.msra.mxu0 %v1320
        %1389 = vmatpush.msra.mxu0 %v1317
        %1390 = vmatmul.f32.gmra.mxu0 %v1228
        %v1391 = vpop.f32.mrf.mxu0
        %v1392 = vadd.f32 0.0, %v1391
        %1393 = vmatmul.f32.gmra.mxu0 %v1231
        %v1394 = vpop.f32.mrf.mxu0
        %v1395 = vadd.f32 0.0, %v1394
        %1396 = vdwg.mxu0
        %v1397 = vadd.f32 %v1289, %v1392
        %v1398 = vadd.f32 %v1290, %v1395
        %v1399 = vadd.f32 %v1397, %v1343
        %v1400 = vadd.f32 %v1398, %v1346
        %1401 = vmatpush.msra.mxu0 0.0
        %1402 = vmatpush.msra.mxu0 0.0
        %1403 = vmatpush.msra.mxu0 0.0
        %1404 = vmatpush.msra.mxu0 0.0
        %1405 = vmatpush.msra.mxu0 0.0
        %1406 = vmatpush.msra.mxu0 0.0
        %1407 = vmatpush.msra.mxu0 0.0
        %1408 = vmatpush.msra.mxu0 0.0
        %1409 = vmatpush.msra.mxu0 0.0
        %1410 = vmatpush.msra.mxu0 0.0
        %1411 = vmatpush.msra.mxu0 0.0
        %1412 = vmatpush.msra.mxu0 0.0
        %1413 = vmatpush.msra.mxu0 0.0
        %1414 = vmatpush.msra.mxu0 0.0
        %1415 = vmatpush.msra.mxu0 %v1372
        %1416 = vmatpush.msra.mxu0 %v1369
        %1417 = vmatmul.f32.gmra.mxu0 %v1261
        %v1418 = vpop.f32.mrf.mxu0
        %v1419 = vadd.f32 0.0, %v1418
        %1420 = vmatmul.f32.gmra.mxu0 %v1264
        %v1421 = vpop.f32.mrf.mxu0
        %v1422 = vadd.f32 0.0, %v1421
        %1423 = vdwg.mxu0
        %v1424 = vadd.f32 %v1399, %v1419
        %v1425 = vadd.f32 %v1400, %v1422
        %v1426 = vmax.f32 %v1424, 0.0
        %v1427 = vmax.f32 %v1425, 0.0
        %v1428 = vld [vmem:[%s18] sm:$0x1]
        %v1430 = vperm.slane %v1428, 0
        %v1432 = vld [vmem:[%s17] sm:$0xff]
        %v1434 = vsel %vm815, %v1426, 0
        %v1437 = vsel %vm815, %v1427, 0
        %1439 = vmatpush.msra.mxu0 0.0
        %1440 = vmatpush.msra.mxu0 0.0
        %1441 = vmatpush.msra.mxu0 0.0
        %1442 = vmatpush.msra.mxu0 0.0
        %1443 = vmatpush.msra.mxu0 0.0
        %1444 = vmatpush.msra.mxu0 0.0
        %1445 = vmatpush.msra.mxu0 0.0
        %1446 = vmatpush.msra.mxu0 0.0
        %1447 = vmatpush.msra.mxu0 0.0
        %1448 = vmatpush.msra.mxu0 0.0
        %1449 = vmatpush.msra.mxu0 0.0
        %1450 = vmatpush.msra.mxu0 0.0
        %1451 = vmatpush.msra.mxu0 0.0
        %1452 = vmatpush.msra.mxu0 0.0
        %1453 = vmatpush.msra.mxu0 0.0
        %1454 = vmatpush.msra.mxu0 %v1432
        %1455 = vmatmul.f32.gmra.mxu0 %v1434
        %v1456 = vpop.f32.mrf.mxu0
        %v1457 = vadd.f32 0.0, %v1456
        %1458 = vmatmul.f32.gmra.mxu0 %v1437
        %v1459 = vpop.f32.mrf.mxu0
        %v1460 = vadd.f32 0.0, %v1459
        %1461 = vdwg.mxu0
        %s1462 = scalar_lea.vmem %s17, 8
        %v1463 = vld [vmem:[%s1462] sm:$0xff]
        %1464 = vmatpush.msra.mxu0 0.0
        %1465 = vmatpush.msra.mxu0 0.0
        %1466 = vmatpush.msra.mxu0 0.0
        %1467 = vmatpush.msra.mxu0 0.0
        %1468 = vmatpush.msra.mxu0 0.0
        %1469 = vmatpush.msra.mxu0 0.0
        %1470 = vmatpush.msra.mxu0 0.0
        %1471 = vmatpush.msra.mxu0 0.0
        %1472 = vmatpush.msra.mxu0 0.0
        %1473 = vmatpush.msra.mxu0 0.0
        %1474 = vmatpush.msra.mxu0 0.0
        %1475 = vmatpush.msra.mxu0 0.0
        %1476 = vmatpush.msra.mxu0 0.0
        %1477 = vmatpush.msra.mxu0 0.0
        %1478 = vmatpush.msra.mxu0 0.0
        %1479 = vmatpush.msra.mxu0 %v1463
        %1480 = vmatmul.f32.gmra.mxu0 %v1434
        %v1481 = vpop.f32.mrf.mxu0
        %v1482 = vadd.f32 0.0, %v1481
        %1483 = vmatmul.f32.gmra.mxu0 %v1437
        %v1484 = vpop.f32.mrf.mxu0
        %v1485 = vadd.f32 0.0, %v1484
        %1486 = vdwg.mxu0
        %s1487 = scalar_lea.vmem %s17, 16
        %v1488 = vld [vmem:[%s1487] sm:$0xff]
        %1489 = vmatpush.msra.mxu0 0.0
        %1490 = vmatpush.msra.mxu0 0.0
        %1491 = vmatpush.msra.mxu0 0.0
        %1492 = vmatpush.msra.mxu0 0.0
        %1493 = vmatpush.msra.mxu0 0.0
        %1494 = vmatpush.msra.mxu0 0.0
        %1495 = vmatpush.msra.mxu0 0.0
        %1496 = vmatpush.msra.mxu0 0.0
        %1497 = vmatpush.msra.mxu0 0.0
        %1498 = vmatpush.msra.mxu0 0.0
        %1499 = vmatpush.msra.mxu0 0.0
        %1500 = vmatpush.msra.mxu0 0.0
        %1501 = vmatpush.msra.mxu0 0.0
        %1502 = vmatpush.msra.mxu0 0.0
        %1503 = vmatpush.msra.mxu0 0.0
        %1504 = vmatpush.msra.mxu0 %v1488
        %1505 = vmatmul.f32.gmra.mxu0 %v1434
        %v1506 = vpop.f32.mrf.mxu0
        %v1507 = vadd.f32 0.0, %v1506
        %1508 = vmatmul.f32.gmra.mxu0 %v1437
        %v1509 = vpop.f32.mrf.mxu0
        %v1510 = vadd.f32 0.0, %v1509
        %1511 = vdwg.mxu0
        %1512 = vmatpush.msra.mxu0 0.0
        %1513 = vmatpush.msra.mxu0 0.0
        %1514 = vmatpush.msra.mxu0 0.0
        %1515 = vmatpush.msra.mxu0 0.0
        %1516 = vmatpush.msra.mxu0 0.0
        %1517 = vmatpush.msra.mxu0 0.0
        %1518 = vmatpush.msra.mxu0 0.0
        %1519 = vmatpush.msra.mxu0 0.0
        %1520 = vmatpush.msra.mxu0 0.0
        %1521 = vmatpush.msra.mxu0 0.0
        %1522 = vmatpush.msra.mxu0 0.0
        %1523 = vmatpush.msra.mxu0 0.0
        %1524 = vmatpush.msra.mxu0 0.0
        %1525 = vmatpush.msra.mxu0 0.0
        %1526 = vmatpush.msra.mxu0 %v1460
        %1527 = vmatpush.msra.mxu0 %v1457
        %1528 = vmatmul.f32.gmra.mxu0 %v1228
        %v1529 = vpop.f32.mrf.mxu0
        %v1530 = vadd.f32 0.0, %v1529
        %1531 = vmatmul.f32.gmra.mxu0 %v1231
        %v1532 = vpop.f32.mrf.mxu0
        %v1533 = vadd.f32 0.0, %v1532
        %1534 = vdwg.mxu0
        %v1535 = vadd.f32 %v1430, %v1530
        %v1536 = vadd.f32 %v1430, %v1533
        %v1537 = vadd.f32 %v1535, %v1482
        %v1538 = vadd.f32 %v1536, %v1485
        %1539 = vmatpush.msra.mxu0 0.0
        %1540 = vmatpush.msra.mxu0 0.0
        %1541 = vmatpush.msra.mxu0 0.0
        %1542 = vmatpush.msra.mxu0 0.0
        %1543 = vmatpush.msra.mxu0 0.0
        %1544 = vmatpush.msra.mxu0 0.0
        %1545 = vmatpush.msra.mxu0 0.0
        %1546 = vmatpush.msra.mxu0 0.0
        %1547 = vmatpush.msra.mxu0 0.0
        %1548 = vmatpush.msra.mxu0 0.0
        %1549 = vmatpush.msra.mxu0 0.0
        %1550 = vmatpush.msra.mxu0 0.0
        %1551 = vmatpush.msra.mxu0 0.0
        %1552 = vmatpush.msra.mxu0 0.0
        %1553 = vmatpush.msra.mxu0 %v1510
        %1554 = vmatpush.msra.mxu0 %v1507
        %1555 = vmatmul.f32.gmra.mxu0 %v1261
        %v1556 = vpop.f32.mrf.mxu0
        %v1557 = vadd.f32 0.0, %v1556
        %1558 = vmatmul.f32.gmra.mxu0 %v1264
        %v1559 = vpop.f32.mrf.mxu0
        %v1560 = vadd.f32 0.0, %v1559
        %1561 = vdwg.mxu0
        %v1562 = vadd.f32 %v1537, %v1557
        %v1563 = vadd.f32 %v1538, %v1560
        %v1564 = vmax.f32 %v1562, 0.0
        %v1565 = vmax.f32 %v1563, 0.0
        %v1566 = vld [vmem:[%s19] sm:$0xff]
        %v1567 = vld [vmem:[%s20] sm:$0x1]
        %v1569 = vperm.slane %v1567, 0
        %v1572 = vsel %vm815, %v1564, 0
        %v1575 = vsel %vm815, %v1565, 0
        %1577 = vmatpush.msra.mxu0 0.0
        %1578 = vmatpush.msra.mxu0 0.0
        %1579 = vmatpush.msra.mxu0 0.0
        %1580 = vmatpush.msra.mxu0 0.0
        %1581 = vmatpush.msra.mxu0 0.0
        %1582 = vmatpush.msra.mxu0 0.0
        %1583 = vmatpush.msra.mxu0 0.0
        %1584 = vmatpush.msra.mxu0 0.0
        %1585 = vmatpush.msra.mxu0 0.0
        %1586 = vmatpush.msra.mxu0 0.0
        %1587 = vmatpush.msra.mxu0 0.0
        %1588 = vmatpush.msra.mxu0 0.0
        %1589 = vmatpush.msra.mxu0 0.0
        %1590 = vmatpush.msra.mxu0 0.0
        %1591 = vmatpush.msra.mxu0 0.0
        %1592 = vmatpush.msra.mxu0 %v1566
        %1593 = vmatmul.f32.gmra.mxu0 %v1572
        %v1594 = vpop.f32.mrf.mxu0
        %v1595 = vadd.f32 %v1569, %v1594
        %1596 = vmatmul.f32.gmra.mxu0 %v1575
        %v1597 = vpop.f32.mrf.mxu0
        %v1598 = vadd.f32 %v1569, %v1597
        %1599 = vdwg.mxu0
        %vm1600 = vcmask 15360
        %1601 = vst.msk [vmem:[%s705] sm:$0xff] %vm1600, %v1595
        %1602 = vst.msk [vmem:[%s705 + $0x8] sm:$0xff] %vm1600, %v1598
        %p1603 = scmp.lt.s32.totalorder %s33, 1
        %s1604 = scalar_select %p1603, %s33, 1
        %s1605 = smul.addr %s1604, 2
        %s1606 = smul.addr %s1605, 8
        %s1607 = scalar_lea.vmem %s21, %s1606
        // Predicated region
        $region109: #{tpu_custom_call.1} parent=103 // pred_check
          %p1608 = pneg %p507
        $region110: #{tpu_custom_call.1} parent=103 // pred_check_branch
          %1610 = sbr.rel (%p1608) target = $region112
        $region111: #{tpu_custom_call.1} parent=103 // pred_region
          _
        $region112: #{tpu_custom_call.1} parent=103 // pred_fallthru
          _
      $region104: #{tpu_custom_call.1} parent=5 // pred_fallthru
        _
      %p1611 = scmp.le.s32.totalorder 2, %s28
      // Predicated region
      $region113: #{tpu_custom_call.1} parent=5 // pred_check
        %p1612 = pneg %p1611
      $region114: #{tpu_custom_call.1} parent=5 // pred_check_branch
        %1614 = sbr.rel (%p1612) target = $region116
      $region115: #{tpu_custom_call.1} parent=5 // pred_region
        %s1615 = ssub.s32 %s28, 2
        // Predicated region
        $region117: #{tpu_custom_call.1} parent=115 // pred_check
          %p1616 = pneg %p513
        $region118: #{tpu_custom_call.1} parent=115 // pred_check_branch
          %1618 = sbr.rel (%p1616) target = $region120
        $region119: #{tpu_custom_call.1} parent=115 // pred_region
          %p1619 = scmp.lt.s32.totalorder %s34, 1
          %s1620 = scalar_select %p1619, %s34, 1
          %s1621 = smul.addr %s1620, 2
          %s1622 = smul.addr %s1621, 8
          %s1623 = scalar_lea.vmem %s21, %s1622
        $region120: #{tpu_custom_call.1} parent=115 // pred_fallthru
          _
      $region116: #{tpu_custom_call.1} parent=5 // pred_fallthru
        _
    $region6: #{tpu_custom_call.1} parent=1 // loop_footer
      %s32 = sadd.s32 1, %s28
    $region7: #{tpu_custom_call.1} parent=1 // loop_footer_branch
      %27 = sbr.rel target = $region3
    $region8: #{tpu_custom_call.1} parent=1 // loop_exit
      _
    %1624 = vsyncpa [#allocation3], 1
    %s1625 = scalar_lea.sflag [#allocation3], 1
    %1626 = vsyncpa %s1625, 1

</llo_original>
